<compile_context>
chip_gen: v7x
topology: tpu7x:2x2x1
jax: 0.10.0
libtpu: 0.0.40
codegen_flags: <defaults>
</compile_context>

<pallas_src>
import functools

import jax
import jax.numpy as jnp
from jax.experimental import pallas as pl
from jax.experimental.pallas import tpu as pltpu


# Packed per-layer rows (each (hidden,) f32):
#   [b1', c1_1, c2_1, bp_1, b2', c1_2, c2_2, bp_2]
_ROWS_PER_LAYER = 8


def _round_up(x, m):
    return pl.cdiv(x, m) * m


def resmlp_kernel(n_layer, x_ref, w_in_ref, w_ref, v_ref, w_out_ref, ob_ref, o_ref):
    """One batch tile of the full ResMLP forward.

    x_ref    : (tile_b, input_dim)          f32   streamed
    w_in_ref : (input_dim, hidden)          bf16  resident
    w_ref    : (2*n_layer, hidden, hidden)  bf16  resident (Affine-folded W1/W2)
    v_ref    : (1 + 8*n_layer, hidden)      f32   resident packed vectors
    w_out_ref: (hidden, d_out_pad)          bf16  resident (output-Affine folded)
    ob_ref   : (1, d_out_pad)               f32   resident (output-Affine folded bias)
    o_ref    : (tile_b, d_out_pad)          out dtype
    """
    bf16 = jnp.bfloat16
    f32 = jnp.float32

    def row(idx):                       # static slice -> free (1, hidden) view
        return v_ref[idx:idx + 1, :]

    def supact(x, c1, c2, bp):
        # (gamma + sigmoid(beta*x)*(1-gamma)) * x, with sigmoid folded into one
        # EUP tanh and the gamma terms precomputed host-side.
        return x * c1 + (x * c2) * jnp.tanh(bp * x)

    # Input projection: K = input_dim (un-padded) bf16 dot, f32 accumulation.
    h = jnp.dot(x_ref[...].astype(bf16), w_in_ref[...],
                preferred_element_type=f32) + row(0)

    # Statically unrolled ResBlock + Tanh stack (fine at small n_layer).  For
    # large n_layer switch to lax.fori_loop with dynamic w_ref/v_ref indexing to
    # bound live ranges, and consider pipeline_mode=pl.Buffered(1) on the
    # resident weight specs once their double-buffered footprint approaches the
    # scoped VMEM limit (v7x: 32 MiB default of 64 MiB physical).
    for n in range(n_layer):
        base = 1 + _ROWS_PER_LAYER * n
        xskip = h
        # norm1 (scalar Affine) is folded into w_ref[2n]/row(base); layer1 Linear:
        t = jnp.dot(h.astype(bf16), w_ref[2 * n],
                    preferred_element_type=f32) + row(base + 0)
        o1 = supact(t, row(base + 1), row(base + 2), row(base + 3))
        # norm2 folded into w_ref[2n+1]/row(base+4); layer2 Linear:
        t2 = jnp.dot(o1.astype(bf16), w_ref[2 * n + 1],
                     preferred_element_type=f32) + row(base + 4)
        o2 = supact(t2, row(base + 5), row(base + 6), row(base + 7)) + xskip
        h = jnp.tanh(o2)                # the Sequential's nn.Tanh() after each block

    # Output projection (final scalar Affine already folded into w_out / ob).
    y = jnp.dot(h.astype(bf16), w_out_ref[...],
                preferred_element_type=f32) + ob_ref[...]
    o_ref[...] = y.astype(o_ref.dtype)


def _pack_params(params, n_layer, hidden, input_dim, output_dim, d_out_pad):
    f32, bf16 = jnp.float32, jnp.bfloat16
    ns = params["norm_scalars"].astype(f32)          # (N, 4): [g1, be1, g2, be2]

    w_in_p = params["w_in"].astype(bf16)             # (input_dim, hidden)

    # Fold the scalar Affines (norm1/norm2) into the Linear weights/biases.
    w1f = ns[:, 0, None, None] * params["w1"]
    w2f = ns[:, 2, None, None] * params["w2"]
    b1f = ns[:, 1, None] * params["w1"].sum(axis=1) + params["b1"]
    b2f = ns[:, 3, None] * params["w2"].sum(axis=1) + params["b2"]
    # Interleave [W1'_0, W2'_0, W1'_1, W2'_1, ...]
    w_stack = jnp.stack([w1f, w2f], axis=1).reshape(
        2 * n_layer, hidden, hidden).astype(bf16)

    # Supact constants: supact(x) = x*c1 + (x*c2)*tanh(bp*x).
    c1_1 = 0.5 * (1.0 + params["a1_gamma"])
    c2_1 = 0.5 * (1.0 - params["a1_gamma"])
    bp_1 = 0.5 * params["a1_beta"]
    c1_2 = 0.5 * (1.0 + params["a2_gamma"])
    c2_2 = 0.5 * (1.0 - params["a2_gamma"])
    bp_2 = 0.5 * params["a2_beta"]

    rows = [params["b_in"]]
    for n in range(n_layer):
        rows += [b1f[n], c1_1[n], c2_1[n], bp_1[n],
                 b2f[n], c1_2[n], c2_2[n], bp_2[n]]
    vec_stack = jnp.stack(rows, axis=0).astype(f32)  # (1 + 8N, hidden)

    # Output Linear with the trailing Affine folded in; lane-pad d_out to 128 so
    # the output store is an unmasked vst (padding columns sliced off outside).
    gain, bias = params["out_affine"][0], params["out_affine"][1]
    w_out_f = gain * params["w_out"]                 # (hidden, d_out)
    b_out_f = gain * params["b_out"] + bias          # (d_out,)
    w_out_p = jnp.zeros((hidden, d_out_pad), f32).at[:, :output_dim].set(
        w_out_f).astype(bf16)
    b_out_p = jnp.zeros((1, d_out_pad), f32).at[0, :output_dim].set(b_out_f)

    return w_in_p, w_stack, vec_stack, w_out_p, b_out_p


def _choose_tiling(b, max_tile_b):
    unit = 16                                  # bf16 sublane packing granule
    b_min = _round_up(b, unit)
    if b_min <= 2 * unit:
        return b_min, 1                        # too little work to split
    # >= 2 grid steps so v7x's two TensorCores both get work on the "parallel"
    # batch axis; more steps only when a tile would exceed max_tile_b rows.
    n_tiles = max(2, pl.cdiv(b_min, max_tile_b))
    tile_b = _round_up(pl.cdiv(b_min, n_tiles), unit)
    return tile_b, n_tiles


def resmlp_forward(x, params, n_layer, *, max_tile_b=1024,
                   out_dtype=jnp.float32, interpret=False):
    x = x.astype(jnp.float32)
    b, input_dim = x.shape
    hidden = params["w_in"].shape[1]
    d_out = params["w_out"].shape[1]
    assert hidden % 128 == 0                    # int_dim * 128 by construction
    d_out_pad = _round_up(d_out, 128)

    w_in_p, w_stack, vec_stack, w_out_p, b_out_p = _pack_params(
        params, n_layer, hidden, input_dim, d_out, d_out_pad)

    tile_b, n_tiles = _choose_tiling(b, max_tile_b)
    b_pad = tile_b * n_tiles
    xp = x if b_pad == b else jnp.zeros((b_pad, input_dim), jnp.float32).at[:b].set(x)

    n_rows = vec_stack.shape[0]
    out_bytes = jnp.dtype(out_dtype).itemsize

    # Advisory roofline hints for XLA scheduling around the custom call.
    matmul_flops = 2 * b_pad * (input_dim * hidden
                                + 2 * n_layer * hidden * hidden
                                + hidden * d_out_pad)
    cost = pl.CostEstimate(
        flops=int(matmul_flops + 14 * b_pad * hidden * n_layer),
        transcendentals=int(3 * n_layer * b_pad * hidden),
        bytes_accessed=int(xp.size * 4 + b_pad * d_out_pad * out_bytes
                           + w_in_p.size * 2 + w_stack.size * 2
                           + vec_stack.size * 4 + w_out_p.size * 2
                           + b_out_p.size * 4),
    )

    # Resident inputs are still double-buffered by the pipeline; raise the scoped
    # VMEM limit only when the footprint demands it (v5e default 16 MiB, v6e/v7x
    # 32 MiB; never exceed v7x's 64 MiB physical VMEM).
    resident_bytes = 2 * (w_in_p.size * 2 + w_stack.size * 2 + vec_stack.size * 4
                          + w_out_p.size * 2 + b_out_p.size * 4)
    stream_bytes = 2 * (tile_b * input_dim * 4 + tile_b * d_out_pad * out_bytes)
    live_bytes = 8 * tile_b * hidden * 4
    vmem_est = resident_bytes + stream_bytes + live_bytes
    vmem_limit = None
    if vmem_est > 24 * 2**20:
        vmem_limit = int(min(64 * 2**20, vmem_est * 5 // 4))

    out_padded = pl.pallas_call(
        functools.partial(resmlp_kernel, n_layer),
        out_shape=jax.ShapeDtypeStruct((b_pad, d_out_pad), out_dtype),
        grid=(n_tiles,),
        in_specs=[
            pl.BlockSpec((tile_b, input_dim), lambda i: (i, 0)),   # x (streamed)
            pl.BlockSpec((input_dim, hidden), lambda i: (0, 0)),   # w_in (resident)
            pl.BlockSpec((2 * n_layer, hidden, hidden),
                         lambda i: (0, 0, 0)),                     # folded W1/W2 stack
            pl.BlockSpec((n_rows, hidden), lambda i: (0, 0)),      # packed vectors
            pl.BlockSpec((hidden, d_out_pad), lambda i: (0, 0)),   # folded w_out
            pl.BlockSpec((1, d_out_pad), lambda i: (0, 0)),        # folded b_out
        ],
        out_specs=pl.BlockSpec((tile_b, d_out_pad), lambda i: (i, 0)),
        compiler_params=pltpu.CompilerParams(
            dimension_semantics=("parallel",),
            vmem_limit_bytes=vmem_limit),
        cost_estimate=cost,
        interpret=interpret,
    )(xp, w_in_p, w_stack, vec_stack, w_out_p, b_out_p)
    return out_padded[:b, :d_out]


# ----------------------------- references ----------------------------------

def _supact_ref(x, gamma, beta):
    inv = jax.nn.sigmoid(beta * x)
    return (gamma + inv * (1.0 - gamma)) * x


def resmlp_reference_f32(x, params, n_layer):
    """Pure-f32 JAX reference with the true PyTorch module semantics."""
    ns = params["norm_scalars"]
    h = x @ params["w_in"] + params["b_in"][None, :]
    for n in range(n_layer):
        xskip = h
        t = h * ns[n, 0] + ns[n, 1]
        t = t @ params["w1"][n] + params["b1"][n][None, :]
        o1 = _supact_ref(t, params["a1_gamma"][n][None, :], params["a1_beta"][n][None, :])
        t2 = o1 * ns[n, 2] + ns[n, 3]
        t2 = t2 @ params["w2"][n] + params["b2"][n][None, :]
        o2 = _supact_ref(t2, params["a2_gamma"][n][None, :], params["a2_beta"][n][None, :]) + xskip
        h = jnp.tanh(o2)
    y = h @ params["w_out"] + params["b_out"][None, :]
    return y * params["out_affine"][0] + params["out_affine"][1]


def resmlp_reference_mixed(x, params, n_layer):
    """Mirrors the kernel numerics exactly (Affine folding, bf16 matmul operands
    with f32 accumulation, tanh-form Supact) for a tight correctness check."""
    bf16, f32 = jnp.bfloat16, jnp.float32
    ns = params["norm_scalars"]

    def supact(v, gamma, beta):
        c1 = 0.5 * (1.0 + gamma)
        c2 = 0.5 * (1.0 - gamma)
        bp = 0.5 * beta
        return v * c1 + (v * c2) * jnp.tanh(bp * v)

    h = jnp.dot(x.astype(bf16), params["w_in"].astype(bf16),
                preferred_element_type=f32) + params["b_in"][None, :]
    for n in range(n_layer):
        xskip = h
        w1f = (ns[n, 0] * params["w1"][n]).astype(bf16)
        b1f = ns[n, 1] * params["w1"][n].sum(axis=0) + params["b1"][n]
        t = jnp.dot(h.astype(bf16), w1f, preferred_element_type=f32) + b1f[None, :]
        o1 = supact(t, params["a1_gamma"][n][None, :], params["a1_beta"][n][None, :])
        w2f = (ns[n, 2] * params["w2"][n]).astype(bf16)
        b2f = ns[n, 3] * params["w2"][n].sum(axis=0) + params["b2"][n]
        t2 = jnp.dot(o1.astype(bf16), w2f, preferred_element_type=f32) + b2f[None, :]
        o2 = supact(t2, params["a2_gamma"][n][None, :], params["a2_beta"][n][None, :]) + xskip
        h = jnp.tanh(o2)
    gain, bias = params["out_affine"][0], params["out_affine"][1]
    w_out_f = (gain * params["w_out"]).astype(bf16)
    b_out_f = gain * params["b_out"] + bias
    return jnp.dot(h.astype(bf16), w_out_f, preferred_element_type=f32) + b_out_f[None, :]


def init_params(key, input_dim, output_dim, hidden, n_layer):
    ks = jax.random.split(key, 14)
    scale = 0.1
    return {
        "w_in": scale * jax.random.normal(ks[0], (input_dim, hidden), jnp.float32),
        "b_in": scale * jax.random.normal(ks[1], (hidden,), jnp.float32),
        "w1": scale * jax.random.normal(ks[2], (n_layer, hidden, hidden), jnp.float32),
        "b1": scale * jax.random.normal(ks[3], (n_layer, hidden), jnp.float32),
        "w2": scale * jax.random.normal(ks[4], (n_layer, hidden, hidden), jnp.float32),
        "b2": scale * jax.random.normal(ks[5], (n_layer, hidden), jnp.float32),
        # Supact params (module init is ones/zeros; randomize to exercise the math).
        "a1_gamma": 1.0 + scale * jax.random.normal(ks[6], (n_layer, hidden), jnp.float32),
        "a1_beta": scale * jax.random.normal(ks[7], (n_layer, hidden), jnp.float32),
        "a2_gamma": 1.0 + scale * jax.random.normal(ks[8], (n_layer, hidden), jnp.float32),
        "a2_beta": scale * jax.random.normal(ks[9], (n_layer, hidden), jnp.float32),
        "w_out": scale * jax.random.normal(ks[10], (hidden, output_dim), jnp.float32),
        "b_out": scale * jax.random.normal(ks[11], (output_dim,), jnp.float32),
        # Per-block scalar Affine params: [gain1, bias1, gain2, bias2]
        "norm_scalars": 1.0 + scale * jax.random.normal(ks[12], (n_layer, 4), jnp.float32),
        # Final Affine: [gain, bias]
        "out_affine": 1.0 + scale * jax.random.normal(ks[13], (2,), jnp.float32),
    }


if __name__ == "__main__":
    # ResMLP(input_dim=8, output_dim=128, int_dim=1, N_layer=2) -> hidden = 128.
    batch = 300          # exercises adaptive tiling: 2 parallel tiles of 160 rows
    input_dim = 8
    output_dim = 128
    int_dim = 1
    n_layer = 2
    hidden = int_dim * 128

    key = jax.random.PRNGKey(0)
    kx, kp = jax.random.split(key)
    x = jax.random.normal(kx, (batch, input_dim), jnp.float32)
    params = init_params(kp, input_dim, output_dim, hidden, n_layer)

    out = resmlp_forward(x, params, n_layer)
    out = jax.block_until_ready(out)
    assert out.shape == (batch, output_dim)

    # Tight check against a reference mirroring the kernel's exact numerics.
    ref_mixed = resmlp_reference_mixed(x, params, n_layer)
    assert jnp.allclose(out, ref_mixed, atol=2e-3, rtol=2e-3), \
        "Pallas output mismatch vs mixed-precision reference"

    # Loose check against the true f32 module semantics (bf16 matmul drift plus
    # the exact-in-real-arithmetic Affine folding reorders the f32 summation).
    ref_f32 = resmlp_reference_f32(x, params, n_layer)
    assert jnp.allclose(out, ref_f32, atol=1e-1, rtol=1e-1), \
        "Pallas output mismatch vs f32 reference"

    # Optional bf16-output variant (halves the dominant HBM write stream); it only
    # changes the final store cast, so it must round-match the f32 result.
    out_bf16 = jax.block_until_ready(
        resmlp_forward(x, params, n_layer, out_dtype=jnp.bfloat16))
    assert out_bf16.dtype == jnp.bfloat16
    assert jnp.allclose(out_bf16.astype(jnp.float32), out, atol=2e-2, rtol=2e-2), \
        "bf16-output variant mismatch"

    print("KERNEL_OK")
</pallas_src>

<mosaic_0001>
module attributes {stable_mosaic.version = 11 : i64} {
  func.func @resmlp_kernel(%arg0: i32, %arg1: memref<160x8xf32, #tpu.memory_space<vmem>>, %arg2: memref<8x128xbf16, #tpu.memory_space<vmem>>, %arg3: memref<4x128x128xbf16, #tpu.memory_space<vmem>>, %arg4: memref<17x128xf32, #tpu.memory_space<vmem>>, %arg5: memref<128x128xbf16, #tpu.memory_space<vmem>>, %arg6: memref<1x128xf32, #tpu.memory_space<vmem>>, %arg7: memref<160x128xf32, #tpu.memory_space<vmem>>) attributes {dimension_semantics = [#tpu.dimension_semantics<parallel>], iteration_bounds = array<i64: 2>, scalar_prefetch = 0 : i64, scratch_operands = 0 : i64, tpu.core_type = #tpu.core_type<tc>, window_params = [{transform_indices = @transform_0, window_bounds = array<i64: 160, 8>}, {pipeline_mode = #tpu.pipeline_mode<synchronous>, transform_indices = @transform_1, window_bounds = array<i64: 8, 128>}, {pipeline_mode = #tpu.pipeline_mode<synchronous>, transform_indices = @transform_2, window_bounds = array<i64: 4, 128, 128>}, {pipeline_mode = #tpu.pipeline_mode<synchronous>, transform_indices = @transform_3, window_bounds = array<i64: 17, 128>}, {pipeline_mode = #tpu.pipeline_mode<synchronous>, transform_indices = @transform_4, window_bounds = array<i64: 128, 128>}, {pipeline_mode = #tpu.pipeline_mode<synchronous>, transform_indices = @transform_5, window_bounds = array<i64: 1, 128>}, {transform_indices = @transform_6, window_bounds = array<i64: 160, 128>}]} {
    %c0 = arith.constant 0 : index
    %c0_0 = arith.constant 0 : index
    %0 = vector.load %arg1[%c0, %c0_0] : memref<160x8xf32, #tpu.memory_space<vmem>>, vector<160x8xf32>
    %1 = arith.truncf %0 : vector<160x8xf32> to vector<160x8xbf16>
    %c0_1 = arith.constant 0 : index
    %c0_2 = arith.constant 0 : index
    %2 = vector.load %arg2[%c0_1, %c0_2] : memref<8x128xbf16, #tpu.memory_space<vmem>>, vector<8x128xbf16>
    %cst = arith.constant dense<0.000000e+00> : vector<160x128xf32>
    %3 = tpu.matmul %1, %2, %cst {dimension_numbers = #tpu.dot_dimension_numbers<[1], [0], [0], [1], [0, 0, 1, 1], [], []>} : vector<160x8xbf16>, vector<8x128xbf16>, vector<160x128xf32> -> vector<160x128xf32>
    %c0_3 = arith.constant 0 : index
    %c0_4 = arith.constant 0 : index
    %4 = vector.load %arg4[%c0_3, %c0_4] : memref<17x128xf32, #tpu.memory_space<vmem>>, vector<1x128xf32>
    %5 = vector.broadcast %4 : vector<1x128xf32> to vector<160x128xf32>
    %6 = arith.addf %3, %5 : vector<160x128xf32>
    %7 = arith.truncf %6 : vector<160x128xf32> to vector<160x128xbf16>
    %c0_5 = arith.constant 0 : index
    %c0_6 = arith.constant 0 : index
    %c0_7 = arith.constant 0 : index
    %8 = vector.load %arg3[%c0_5, %c0_6, %c0_7] : memref<4x128x128xbf16, #tpu.memory_space<vmem>>, vector<1x128x128xbf16>
    %9 = vector.shape_cast %8 : vector<1x128x128xbf16> to vector<128x128xbf16>
    %cst_8 = arith.constant dense<0.000000e+00> : vector<160x128xf32>
    %10 = tpu.matmul %7, %9, %cst_8 {dimension_numbers = #tpu.dot_dimension_numbers<[1], [0], [0], [1], [0, 0, 1, 1], [], []>} : vector<160x128xbf16>, vector<128x128xbf16>, vector<160x128xf32> -> vector<160x128xf32>
    %c1 = arith.constant 1 : index
    %c0_9 = arith.constant 0 : index
    %11 = vector.load %arg4[%c1, %c0_9] : memref<17x128xf32, #tpu.memory_space<vmem>>, vector<1x128xf32>
    %12 = vector.broadcast %11 : vector<1x128xf32> to vector<160x128xf32>
    %13 = arith.addf %10, %12 : vector<160x128xf32>
    %c2 = arith.constant 2 : index
    %c0_10 = arith.constant 0 : index
    %14 = vector.load %arg4[%c2, %c0_10] : memref<17x128xf32, #tpu.memory_space<vmem>>, vector<1x128xf32>
    %c3 = arith.constant 3 : index
    %c0_11 = arith.constant 0 : index
    %15 = vector.load %arg4[%c3, %c0_11] : memref<17x128xf32, #tpu.memory_space<vmem>>, vector<1x128xf32>
    %c4 = arith.constant 4 : index
    %c0_12 = arith.constant 0 : index
    %16 = vector.load %arg4[%c4, %c0_12] : memref<17x128xf32, #tpu.memory_space<vmem>>, vector<1x128xf32>
    %17 = vector.broadcast %14 : vector<1x128xf32> to vector<160x128xf32>
    %18 = arith.mulf %13, %17 : vector<160x128xf32>
    %19 = vector.broadcast %15 : vector<1x128xf32> to vector<160x128xf32>
    %20 = arith.mulf %13, %19 : vector<160x128xf32>
    %21 = vector.broadcast %16 : vector<1x128xf32> to vector<160x128xf32>
    %22 = arith.mulf %21, %13 : vector<160x128xf32>
    %23 = math.tanh %22 : vector<160x128xf32>
    %24 = arith.mulf %20, %23 : vector<160x128xf32>
    %25 = arith.addf %18, %24 : vector<160x128xf32>
    %26 = arith.truncf %25 : vector<160x128xf32> to vector<160x128xbf16>
    %c1_13 = arith.constant 1 : index
    %c0_14 = arith.constant 0 : index
    %c0_15 = arith.constant 0 : index
    %27 = vector.load %arg3[%c1_13, %c0_14, %c0_15] : memref<4x128x128xbf16, #tpu.memory_space<vmem>>, vector<1x128x128xbf16>
    %28 = vector.shape_cast %27 : vector<1x128x128xbf16> to vector<128x128xbf16>
    %cst_16 = arith.constant dense<0.000000e+00> : vector<160x128xf32>
    %29 = tpu.matmul %26, %28, %cst_16 {dimension_numbers = #tpu.dot_dimension_numbers<[1], [0], [0], [1], [0, 0, 1, 1], [], []>} : vector<160x128xbf16>, vector<128x128xbf16>, vector<160x128xf32> -> vector<160x128xf32>
    %c5 = arith.constant 5 : index
    %c0_17 = arith.constant 0 : index
    %30 = vector.load %arg4[%c5, %c0_17] : memref<17x128xf32, #tpu.memory_space<vmem>>, vector<1x128xf32>
    %31 = vector.broadcast %30 : vector<1x128xf32> to vector<160x128xf32>
    %32 = arith.addf %29, %31 : vector<160x128xf32>
    %c6 = arith.constant 6 : index
    %c0_18 = arith.constant 0 : index
    %33 = vector.load %arg4[%c6, %c0_18] : memref<17x128xf32, #tpu.memory_space<vmem>>, vector<1x128xf32>
    %c7 = arith.constant 7 : index
    %c0_19 = arith.constant 0 : index
    %34 = vector.load %arg4[%c7, %c0_19] : memref<17x128xf32, #tpu.memory_space<vmem>>, vector<1x128xf32>
    %c8 = arith.constant 8 : index
    %c0_20 = arith.constant 0 : index
    %35 = vector.load %arg4[%c8, %c0_20] : memref<17x128xf32, #tpu.memory_space<vmem>>, vector<1x128xf32>
    %36 = vector.broadcast %33 : vector<1x128xf32> to vector<160x128xf32>
    %37 = arith.mulf %32, %36 : vector<160x128xf32>
    %38 = vector.broadcast %34 : vector<1x128xf32> to vector<160x128xf32>
    %39 = arith.mulf %32, %38 : vector<160x128xf32>
    %40 = vector.broadcast %35 : vector<1x128xf32> to vector<160x128xf32>
    %41 = arith.mulf %40, %32 : vector<160x128xf32>
    %42 = math.tanh %41 : vector<160x128xf32>
    %43 = arith.mulf %39, %42 : vector<160x128xf32>
    %44 = arith.addf %37, %43 : vector<160x128xf32>
    %45 = arith.addf %44, %6 : vector<160x128xf32>
    %46 = math.tanh %45 : vector<160x128xf32>
    %47 = arith.truncf %46 : vector<160x128xf32> to vector<160x128xbf16>
    %c2_21 = arith.constant 2 : index
    %c0_22 = arith.constant 0 : index
    %c0_23 = arith.constant 0 : index
    %48 = vector.load %arg3[%c2_21, %c0_22, %c0_23] : memref<4x128x128xbf16, #tpu.memory_space<vmem>>, vector<1x128x128xbf16>
    %49 = vector.shape_cast %48 : vector<1x128x128xbf16> to vector<128x128xbf16>
    %cst_24 = arith.constant dense<0.000000e+00> : vector<160x128xf32>
    %50 = tpu.matmul %47, %49, %cst_24 {dimension_numbers = #tpu.dot_dimension_numbers<[1], [0], [0], [1], [0, 0, 1, 1], [], []>} : vector<160x128xbf16>, vector<128x128xbf16>, vector<160x128xf32> -> vector<160x128xf32>
    %c9 = arith.constant 9 : index
    %c0_25 = arith.constant 0 : index
    %51 = vector.load %arg4[%c9, %c0_25] : memref<17x128xf32, #tpu.memory_space<vmem>>, vector<1x128xf32>
    %52 = vector.broadcast %51 : vector<1x128xf32> to vector<160x128xf32>
    %53 = arith.addf %50, %52 : vector<160x128xf32>
    %c10 = arith.constant 10 : index
    %c0_26 = arith.constant 0 : index
    %54 = vector.load %arg4[%c10, %c0_26] : memref<17x128xf32, #tpu.memory_space<vmem>>, vector<1x128xf32>
    %c11 = arith.constant 11 : index
    %c0_27 = arith.constant 0 : index
    %55 = vector.load %arg4[%c11, %c0_27] : memref<17x128xf32, #tpu.memory_space<vmem>>, vector<1x128xf32>
    %c12 = arith.constant 12 : index
    %c0_28 = arith.constant 0 : index
    %56 = vector.load %arg4[%c12, %c0_28] : memref<17x128xf32, #tpu.memory_space<vmem>>, vector<1x128xf32>
    %57 = vector.broadcast %54 : vector<1x128xf32> to vector<160x128xf32>
    %58 = arith.mulf %53, %57 : vector<160x128xf32>
    %59 = vector.broadcast %55 : vector<1x128xf32> to vector<160x128xf32>
    %60 = arith.mulf %53, %59 : vector<160x128xf32>
    %61 = vector.broadcast %56 : vector<1x128xf32> to vector<160x128xf32>
    %62 = arith.mulf %61, %53 : vector<160x128xf32>
    %63 = math.tanh %62 : vector<160x128xf32>
    %64 = arith.mulf %60, %63 : vector<160x128xf32>
    %65 = arith.addf %58, %64 : vector<160x128xf32>
    %66 = arith.truncf %65 : vector<160x128xf32> to vector<160x128xbf16>
    %c3_29 = arith.constant 3 : index
    %c0_30 = arith.constant 0 : index
    %c0_31 = arith.constant 0 : index
    %67 = vector.load %arg3[%c3_29, %c0_30, %c0_31] : memref<4x128x128xbf16, #tpu.memory_space<vmem>>, vector<1x128x128xbf16>
    %68 = vector.shape_cast %67 : vector<1x128x128xbf16> to vector<128x128xbf16>
    %cst_32 = arith.constant dense<0.000000e+00> : vector<160x128xf32>
    %69 = tpu.matmul %66, %68, %cst_32 {dimension_numbers = #tpu.dot_dimension_numbers<[1], [0], [0], [1], [0, 0, 1, 1], [], []>} : vector<160x128xbf16>, vector<128x128xbf16>, vector<160x128xf32> -> vector<160x128xf32>
    %c13 = arith.constant 13 : index
    %c0_33 = arith.constant 0 : index
    %70 = vector.load %arg4[%c13, %c0_33] : memref<17x128xf32, #tpu.memory_space<vmem>>, vector<1x128xf32>
    %71 = vector.broadcast %70 : vector<1x128xf32> to vector<160x128xf32>
    %72 = arith.addf %69, %71 : vector<160x128xf32>
    %c14 = arith.constant 14 : index
    %c0_34 = arith.constant 0 : index
    %73 = vector.load %arg4[%c14, %c0_34] : memref<17x128xf32, #tpu.memory_space<vmem>>, vector<1x128xf32>
    %c15 = arith.constant 15 : index
    %c0_35 = arith.constant 0 : index
    %74 = vector.load %arg4[%c15, %c0_35] : memref<17x128xf32, #tpu.memory_space<vmem>>, vector<1x128xf32>
    %c16 = arith.constant 16 : index
    %c0_36 = arith.constant 0 : index
    %75 = vector.load %arg4[%c16, %c0_36] : memref<17x128xf32, #tpu.memory_space<vmem>>, vector<1x128xf32>
    %76 = vector.broadcast %73 : vector<1x128xf32> to vector<160x128xf32>
    %77 = arith.mulf %72, %76 : vector<160x128xf32>
    %78 = vector.broadcast %74 : vector<1x128xf32> to vector<160x128xf32>
    %79 = arith.mulf %72, %78 : vector<160x128xf32>
    %80 = vector.broadcast %75 : vector<1x128xf32> to vector<160x128xf32>
    %81 = arith.mulf %80, %72 : vector<160x128xf32>
    %82 = math.tanh %81 : vector<160x128xf32>
    %83 = arith.mulf %79, %82 : vector<160x128xf32>
    %84 = arith.addf %77, %83 : vector<160x128xf32>
    %85 = arith.addf %84, %46 : vector<160x128xf32>
    %86 = math.tanh %85 : vector<160x128xf32>
    %87 = arith.truncf %86 : vector<160x128xf32> to vector<160x128xbf16>
    %c0_37 = arith.constant 0 : index
    %c0_38 = arith.constant 0 : index
    %88 = vector.load %arg5[%c0_37, %c0_38] : memref<128x128xbf16, #tpu.memory_space<vmem>>, vector<128x128xbf16>
    %cst_39 = arith.constant dense<0.000000e+00> : vector<160x128xf32>
    %89 = tpu.matmul %87, %88, %cst_39 {dimension_numbers = #tpu.dot_dimension_numbers<[1], [0], [0], [1], [0, 0, 1, 1], [], []>} : vector<160x128xbf16>, vector<128x128xbf16>, vector<160x128xf32> -> vector<160x128xf32>
    %c0_40 = arith.constant 0 : index
    %c0_41 = arith.constant 0 : index
    %90 = vector.load %arg6[%c0_40, %c0_41] : memref<1x128xf32, #tpu.memory_space<vmem>>, vector<1x128xf32>
    %91 = vector.broadcast %90 : vector<1x128xf32> to vector<160x128xf32>
    %92 = arith.addf %89, %91 : vector<160x128xf32>
    %c0_42 = arith.constant 0 : index
    %c0_43 = arith.constant 0 : index
    %93 = vector.load %arg7[%c0_42, %c0_43] : memref<160x128xf32, #tpu.memory_space<vmem>>, vector<160x128xf32>
    tpu.vector_store %arg7[%c0_42, %c0_43], %92 {strides = array<i32>} : memref<160x128xf32, #tpu.memory_space<vmem>>, vector<160x128xf32>,
    return
  }
  func.func @transform_0(%arg0: i32) -> (i32, i32) {
    %c0_i32 = arith.constant 0 : i32
    %c0_i32_0 = arith.constant 0 : i32
    return %arg0, %c0_i32 : i32, i32
  }
  func.func @transform_1(%arg0: i32) -> (i32, i32) {
    %c0_i32 = arith.constant 0 : i32
    %c0_i32_0 = arith.constant 0 : i32
    %c0_i32_1 = arith.constant 0 : i32
    return %c0_i32, %c0_i32_0 : i32, i32
  }
  func.func @transform_2(%arg0: i32) -> (i32, i32, i32) {
    %c0_i32 = arith.constant 0 : i32
    %c0_i32_0 = arith.constant 0 : i32
    %c0_i32_1 = arith.constant 0 : i32
    %c0_i32_2 = arith.constant 0 : i32
    return %c0_i32, %c0_i32_0, %c0_i32_1 : i32, i32, i32
  }
  func.func @transform_3(%arg0: i32) -> (i32, i32) {
    %c0_i32 = arith.constant 0 : i32
    %c0_i32_0 = arith.constant 0 : i32
    %c0_i32_1 = arith.constant 0 : i32
    return %c0_i32, %c0_i32_0 : i32, i32
  }
  func.func @transform_4(%arg0: i32) -> (i32, i32) {
    %c0_i32 = arith.constant 0 : i32
    %c0_i32_0 = arith.constant 0 : i32
    %c0_i32_1 = arith.constant 0 : i32
    return %c0_i32, %c0_i32_0 : i32, i32
  }
  func.func @transform_5(%arg0: i32) -> (i32, i32) {
    %c0_i32 = arith.constant 0 : i32
    %c0_i32_0 = arith.constant 0 : i32
    %c0_i32_1 = arith.constant 0 : i32
    return %c0_i32, %c0_i32_0 : i32, i32
  }
  func.func @transform_6(%arg0: i32) -> (i32, i32) {
    %c0_i32 = arith.constant 0 : i32
    %c0_i32_0 = arith.constant 0 : i32
    return %arg0, %c0_i32 : i32, i32
  }
}

</mosaic_0001>

<llo_original>
// kernel: tpu_custom_call.1
$region0: #{tpu_custom_call.1}
  #allocation0 [shape = 'u32[]', space=smem, size = 0x4, offset = 0x4, fixed_abs, tag = 'smem constant byte address 0x4 - core index']
  #allocation1 [shape = 'u32[144,128]{1,0:T(1,128)}', space=vmem, size = 0x12000, scoped, tag = 'internal scratch']
  %s0 = inlined_call_operand.vmem [shape: f32[320,8], index: 0, kind: input, shape index: {}]
  %s1 = inlined_call_operand.vmem [shape: bf16[8,128], index: 1, kind: input, shape index: {}]
  %s2 = inlined_call_operand.vmem [shape: bf16[4,128,128], index: 2, kind: input, shape index: {}]
  %s3 = inlined_call_operand.vmem [shape: f32[17,128], index: 3, kind: input, shape index: {}]
  %s4 = inlined_call_operand.vmem [shape: bf16[128,128], index: 4, kind: input, shape index: {}]
  %s5 = inlined_call_operand.vmem [shape: f32[1,128], index: 5, kind: input, shape index: {}]
  %s6 = inlined_call_operand.hbm [shape: f32[320,128], index: 6, kind: output, shape index: {}]
  %s7 = sld [smem:[#allocation0]]
  $region57: #{tpu_custom_call.1} parent=0
    _
  %s9 = ssub.s32 1, %s7
  %s10 = scalar_select 0, %s9, %s7
  $region1: #{tpu_custom_call.1} parent=0
    #allocation2 [shape = 'u8[163840]{0}', space=vmem, size = 0x28000, scoped, tag = 'output window, operand 0']
    #allocation3 [shape = 's32[2]{0}', space=sflag, size = 0x8, scoped, tag = 'scoped memory for tpu_custom_call.1']
    %11 = vsyncpa [#allocation3], 0
    %s12 = scalar_lea.sflag [#allocation3], 1
    %13 = vsyncpa %s12, 0
    loop: start=0, step=1, limit=4
    $region2: #{tpu_custom_call.1} parent=1 // loop_pre_header
      _
    $region3: #{tpu_custom_call.1} parent=1 // loop_header
      %s15 = sphi 0, %s19
      %p16 = scmp.ge.s32.totalorder %s15, 4
      %s25 = sphi 0, %s27
      %s28 = sphi 0, %s25
      %s29 = sphi 0, %s28
      %s45 = sphi 0, %s29
      %s49 = sphi 0, %s49
      %s51 = sphi 0, %s49
      %s52 = sphi 0, %s51
      %s66 = sphi 0, %s52
      %s70 = sphi 0, %s70
      %s72 = sphi 0, %s70
      %s73 = sphi 0, %s72
      %s87 = sphi 0, %s73
      %s91 = sphi 0, %s91
      %s93 = sphi 0, %s91
      %s94 = sphi 0, %s93
      %s108 = sphi 0, %s94
      %s112 = sphi 0, %s112
      %s114 = sphi 0, %s112
      %s115 = sphi 0, %s114
      %s129 = sphi 0, %s115
      %s133 = sphi 0, %s133
      %s135 = sphi 0, %s133
      %s136 = sphi 0, %s135
      %s150 = sphi 0, %s136
      %s156 = sphi 0, %s158
      %s159 = sphi 0, %s156
      %s160 = sphi 0, %s159
      %s176 = sphi 0, %s160
    $region4: #{tpu_custom_call.1} parent=1 // loop_header_branch
      %18 = sbr.rel (%p16) target = $region8
    $region5: #{tpu_custom_call.1} parent=1 // loop_body
      %s20 = ssub.s32 %s15, 1
      %s21 = ssub.s32 %s15, 2
      %s22 = sadd.s32 %s15, 1
      %s23 = ssub.s32 %s15, %s22
      %p24 = scmp.eq.s32.totalorder %s23, 0
      %s26 = sadd.s32 %s25, 1
      %s27 = scalar_select %p24, %s25, %s26
      %p30 = pneg %p24
      %p31 = scmp.eq.s32.totalorder %s15, 1
      %p32 = por %p30, %p31
      %p33 = scmp.ne.s32.totalorder %s25, %s28
      %p34 = scmp.eq.s32.totalorder %s15, 0
      %p35 = por %p33, %p34
      %p36 = scmp.ne.s32.totalorder %s25, %s28
      %p37 = scmp.eq.s32.totalorder %s20, 1
      %p38 = por %p36, %p37
      %p39 = scmp.ne.s32.totalorder %s28, %s29
      %p40 = scmp.eq.s32.totalorder %s20, 0
      %p41 = por %p39, %p40
      %p42 = scmp.ne.s32.totalorder %s28, %s29
      %p43 = scmp.eq.s32.totalorder %s21, 1
      %p44 = por %p42, %p43
      %p46 = scmp.ne.s32.totalorder %s29, %s45
      %p47 = scmp.eq.s32.totalorder %s21, 0
      %p48 = por %p46, %p47
      %s50 = sadd.s32 %s49, 1
      %p53 = scmp.eq.s32.totalorder %s15, 1
      %p54 = scmp.ne.s32.totalorder %s49, %s51
      %p55 = scmp.eq.s32.totalorder %s15, 0
      %p56 = por %p54, %p55
      %p57 = scmp.ne.s32.totalorder %s49, %s51
      %p58 = scmp.eq.s32.totalorder %s20, 1
      %p59 = por %p57, %p58
      %p60 = scmp.ne.s32.totalorder %s51, %s52
      %p61 = scmp.eq.s32.totalorder %s20, 0
      %p62 = por %p60, %p61
      %p63 = scmp.ne.s32.totalorder %s51, %s52
      %p64 = scmp.eq.s32.totalorder %s21, 1
      %p65 = por %p63, %p64
      %p67 = scmp.ne.s32.totalorder %s52, %s66
      %p68 = scmp.eq.s32.totalorder %s21, 0
      %p69 = por %p67, %p68
      %s71 = sadd.s32 %s70, 1
      %p74 = scmp.eq.s32.totalorder %s15, 1
      %p75 = scmp.ne.s32.totalorder %s70, %s72
      %p76 = scmp.eq.s32.totalorder %s15, 0
      %p77 = por %p75, %p76
      %p78 = scmp.ne.s32.totalorder %s70, %s72
      %p79 = scmp.eq.s32.totalorder %s20, 1
      %p80 = por %p78, %p79
      %p81 = scmp.ne.s32.totalorder %s72, %s73
      %p82 = scmp.eq.s32.totalorder %s20, 0
      %p83 = por %p81, %p82
      %p84 = scmp.ne.s32.totalorder %s72, %s73
      %p85 = scmp.eq.s32.totalorder %s21, 1
      %p86 = por %p84, %p85
      %p88 = scmp.ne.s32.totalorder %s73, %s87
      %p89 = scmp.eq.s32.totalorder %s21, 0
      %p90 = por %p88, %p89
      %s92 = sadd.s32 %s91, 1
      %p95 = scmp.eq.s32.totalorder %s15, 1
      %p96 = scmp.ne.s32.totalorder %s91, %s93
      %p97 = scmp.eq.s32.totalorder %s15, 0
      %p98 = por %p96, %p97
      %p99 = scmp.ne.s32.totalorder %s91, %s93
      %p100 = scmp.eq.s32.totalorder %s20, 1
      %p101 = por %p99, %p100
      %p102 = scmp.ne.s32.totalorder %s93, %s94
      %p103 = scmp.eq.s32.totalorder %s20, 0
      %p104 = por %p102, %p103
      %p105 = scmp.ne.s32.totalorder %s93, %s94
      %p106 = scmp.eq.s32.totalorder %s21, 1
      %p107 = por %p105, %p106
      %p109 = scmp.ne.s32.totalorder %s94, %s108
      %p110 = scmp.eq.s32.totalorder %s21, 0
      %p111 = por %p109, %p110
      %s113 = sadd.s32 %s112, 1
      %p116 = scmp.eq.s32.totalorder %s15, 1
      %p117 = scmp.ne.s32.totalorder %s112, %s114
      %p118 = scmp.eq.s32.totalorder %s15, 0
      %p119 = por %p117, %p118
      %p120 = scmp.ne.s32.totalorder %s112, %s114
      %p121 = scmp.eq.s32.totalorder %s20, 1
      %p122 = por %p120, %p121
      %p123 = scmp.ne.s32.totalorder %s114, %s115
      %p124 = scmp.eq.s32.totalorder %s20, 0
      %p125 = por %p123, %p124
      %p126 = scmp.ne.s32.totalorder %s114, %s115
      %p127 = scmp.eq.s32.totalorder %s21, 1
      %p128 = por %p126, %p127
      %p130 = scmp.ne.s32.totalorder %s115, %s129
      %p131 = scmp.eq.s32.totalorder %s21, 0
      %p132 = por %p130, %p131
      %s134 = sadd.s32 %s133, 1
      %p137 = scmp.eq.s32.totalorder %s15, 1
      %p138 = scmp.ne.s32.totalorder %s133, %s135
      %p139 = scmp.eq.s32.totalorder %s15, 0
      %p140 = por %p138, %p139
      %p141 = scmp.ne.s32.totalorder %s133, %s135
      %p142 = scmp.eq.s32.totalorder %s20, 1
      %p143 = por %p141, %p142
      %p144 = scmp.ne.s32.totalorder %s135, %s136
      %p145 = scmp.eq.s32.totalorder %s20, 0
      %p146 = por %p144, %p145
      %p147 = scmp.ne.s32.totalorder %s135, %s136
      %p148 = scmp.eq.s32.totalorder %s21, 1
      %p149 = por %p147, %p148
      %p151 = scmp.ne.s32.totalorder %s136, %s150
      %p152 = scmp.eq.s32.totalorder %s21, 0
      %p153 = por %p151, %p152
      %s154 = ssub.s32 %s15, %s22
      %p155 = scmp.eq.s32.totalorder %s154, 0
      %s157 = sadd.s32 %s156, 1
      %s158 = scalar_select %p155, %s156, %s157
      %p161 = pneg %p155
      %p162 = scmp.eq.s32.totalorder %s15, 1
      %p163 = por %p161, %p162
      %p164 = scmp.ne.s32.totalorder %s156, %s159
      %p165 = scmp.eq.s32.totalorder %s15, 0
      %p166 = por %p164, %p165
      %p167 = scmp.ne.s32.totalorder %s156, %s159
      %p168 = scmp.eq.s32.totalorder %s20, 1
      %p169 = por %p167, %p168
      %p170 = scmp.ne.s32.totalorder %s159, %s160
      %p171 = scmp.eq.s32.totalorder %s20, 0
      %p172 = por %p170, %p171
      %p173 = scmp.ne.s32.totalorder %s159, %s160
      %p174 = scmp.eq.s32.totalorder %s21, 1
      %p175 = por %p173, %p174
      %p177 = scmp.ne.s32.totalorder %s160, %s176
      %p178 = scmp.eq.s32.totalorder %s21, 0
      %p179 = por %p177, %p178
      %p180 = scmp.le.s32.totalorder 1, %s15
      %p181 = scmp.lt.s32.totalorder %s15, 3
      %p182 = pnand %p180, %p181
      %p183 = pneg %p182
      // Predicated region
      $region9: #{tpu_custom_call.1} parent=5 // pred_check
        _
      $region10: #{tpu_custom_call.1} parent=5 // pred_check_branch
        %185 = sbr.rel (%p182) target = $region12
      $region11: #{tpu_custom_call.1} parent=5 // pred_region
        %s186 = ssub.s32 %s15, 1
        // Predicated region
        $region13: #{tpu_custom_call.1} parent=11 // pred_check
          %p187 = pneg %p62
        $region14: #{tpu_custom_call.1} parent=11 // pred_check_branch
          %189 = sbr.rel (%p187) target = $region16
        $region15: #{tpu_custom_call.1} parent=11 // pred_region
          _
        $region16: #{tpu_custom_call.1} parent=11 // pred_fallthru
          _
        // Predicated region
        $region17: #{tpu_custom_call.1} parent=11 // pred_check
          %p190 = pneg %p83
        $region18: #{tpu_custom_call.1} parent=11 // pred_check_branch
          %192 = sbr.rel (%p190) target = $region20
        $region19: #{tpu_custom_call.1} parent=11 // pred_region
          _
        $region20: #{tpu_custom_call.1} parent=11 // pred_fallthru
          _
        // Predicated region
        $region21: #{tpu_custom_call.1} parent=11 // pred_check
          %p193 = pneg %p104
        $region22: #{tpu_custom_call.1} parent=11 // pred_check_branch
          %195 = sbr.rel (%p193) target = $region24
        $region23: #{tpu_custom_call.1} parent=11 // pred_region
          _
        $region24: #{tpu_custom_call.1} parent=11 // pred_fallthru
          _
        // Predicated region
        $region25: #{tpu_custom_call.1} parent=11 // pred_check
          %p196 = pneg %p125
        $region26: #{tpu_custom_call.1} parent=11 // pred_check_branch
          %198 = sbr.rel (%p196) target = $region28
        $region27: #{tpu_custom_call.1} parent=11 // pred_region
          _
        $region28: #{tpu_custom_call.1} parent=11 // pred_fallthru
          _
        // Predicated region
        $region29: #{tpu_custom_call.1} parent=11 // pred_check
          %p199 = pneg %p146
        $region30: #{tpu_custom_call.1} parent=11 // pred_check_branch
          %201 = sbr.rel (%p199) target = $region32
        $region31: #{tpu_custom_call.1} parent=11 // pred_region
          _
        $region32: #{tpu_custom_call.1} parent=11 // pred_fallthru
          _
      $region12: #{tpu_custom_call.1} parent=5 // pred_fallthru
        _
      %p202 = scmp.lt.s32.totalorder %s15, 2
      // Predicated region
      $region33: #{tpu_custom_call.1} parent=5 // pred_check
        %p203 = pneg %p202
      $region34: #{tpu_custom_call.1} parent=5 // pred_check_branch
        %205 = sbr.rel (%p203) target = $region36
      $region35: #{tpu_custom_call.1} parent=5 // pred_region
        // Predicated region
        $region37: #{tpu_custom_call.1} parent=35 // pred_check
          %p206 = pneg %p35
        $region38: #{tpu_custom_call.1} parent=35 // pred_check_branch
          %208 = sbr.rel (%p206) target = $region40
        $region39: #{tpu_custom_call.1} parent=35 // pred_region
          %s209 = smul.u32 20, %s15
          %p210 = scmp.lt.s32.totalorder %s209, 39
          %s211 = scalar_select %p210, %s209, 39
          %s212 = smul.addr %s211, 8
          %s213 = scalar_lea.vmem %s0, %s212
          %s214 = smul.u32 20, %s15
        $region40: #{tpu_custom_call.1} parent=35 // pred_fallthru
          _
      $region36: #{tpu_custom_call.1} parent=5 // pred_fallthru
        _
      %p215 = scmp.le.s32.totalorder 1, %s15
      %p216 = scmp.lt.s32.totalorder %s15, 3
      %p217 = pnand %p215, %p216
      %p218 = pneg %p217
      // Predicated region
      $region41: #{tpu_custom_call.1} parent=5 // pred_check
        _
      $region42: #{tpu_custom_call.1} parent=5 // pred_check_branch
        %220 = sbr.rel (%p217) target = $region44
      $region43: #{tpu_custom_call.1} parent=5 // pred_region
        %s221 = ssub.s32 %s15, 1
        %s222 = smul.u32 20, %s20
        %p223 = scmp.lt.s32.totalorder %s222, 39
        %s224 = scalar_select %p223, %s222, 39
        %s225 = smul.addr %s224, 8
        %s226 = scalar_lea.vmem %s0, %s225
        %p227 = pneg %p41
        %p228 = pneg %p38
        %p229 = pneg %p62
        %p230 = pneg %p59
        %p231 = pneg %p83
        %p232 = pneg %p80
        %p233 = pneg %p104
        %p234 = pneg %p101
        %p235 = pneg %p125
        %p236 = pneg %p122
        %p237 = pneg %p146
        %p238 = pneg %p143
        %p239 = pneg %p172
        %p240 = pneg %p169
        %s241 = sand.u32 %s159, 1
        %s242 = scalar_lea.sflag [#allocation3], %s241
        %s243 = sand.u32 %s159, 1
        %s244 = smul.addr %s243, 160
        %s245 = scalar_lea.vmem [#allocation2], %s244
        %s246 = smul.u32 20, %s20
        %p247 = scmp.lt.s32.totalorder %s246, 39
        %s248 = scalar_select %p247, %s246, 39
        %s249 = smul.addr %s248, 8
        %s250 = scalar_lea.vmem %s0, %s249
        %s251 = smul.u32 20, %s20
        %s252 = smul.u32 20, %s20
        %v254 = vld [vmem:[%s250] sm:$0xff]
        %v255 = vld [vmem:[%s250 + $0x8] sm:$0xff]
        %v256 = vld [vmem:[%s250 + $0x10] sm:$0xff]
        %v257 = vld [vmem:[%s250 + $0x18] sm:$0xff]
        %v258 = vld [vmem:[%s250 + $0x20] sm:$0xff]
        %v259 = vld [vmem:[%s250 + $0x28] sm:$0xff]
        %v260 = vld [vmem:[%s250 + $0x30] sm:$0xff]
        %v261 = vld [vmem:[%s250 + $0x38] sm:$0xff]
        %v262 = vld [vmem:[%s250 + $0x40] sm:$0xff]
        %v263 = vld [vmem:[%s250 + $0x48] sm:$0xff]
        %v264 = vld [vmem:[%s250 + $0x50] sm:$0xff]
        %v265 = vld [vmem:[%s250 + $0x58] sm:$0xff]
        %v266 = vld [vmem:[%s250 + $0x60] sm:$0xff]
        %v267 = vld [vmem:[%s250 + $0x68] sm:$0xff]
        %v268 = vld [vmem:[%s250 + $0x70] sm:$0xff]
        %v269 = vld [vmem:[%s250 + $0x78] sm:$0xff]
        %v270 = vld [vmem:[%s250 + $0x80] sm:$0xff]
        %v271 = vld [vmem:[%s250 + $0x88] sm:$0xff]
        %v272 = vld [vmem:[%s250 + $0x90] sm:$0xff]
        %v273 = vld [vmem:[%s250 + $0x98] sm:$0xff]
        %v274 = vpack.c.bf16 %v255, %v254
        %v275 = vpack.c.bf16 %v257, %v256
        %v276 = vpack.c.bf16 %v259, %v258
        %v277 = vpack.c.bf16 %v261, %v260
        %v278 = vpack.c.bf16 %v263, %v262
        %v279 = vpack.c.bf16 %v265, %v264
        %v280 = vpack.c.bf16 %v267, %v266
        %v281 = vpack.c.bf16 %v269, %v268
        %v282 = vpack.c.bf16 %v271, %v270
        %v283 = vpack.c.bf16 %v273, %v272
        %v284 = vld [vmem:[%s1] sm:$0xf]
        %v285 = vld [vmem:[%s3] sm:$0x1]
        %v286 = vlaneseq
        %v287 = vshrl.u32 %v286, 7
        %v288 = vsub.s32 0, %v287
        %v289 = vrot.slane %v285, %v288
        %vm290 = vcmask 64512
        %v292 = vsel %vm290, %v274, 0
        %v295 = vsel %vm290, %v275, 0
        %v298 = vsel %vm290, %v276, 0
        %v301 = vsel %vm290, %v277, 0
        %v304 = vsel %vm290, %v278, 0
        %v307 = vsel %vm290, %v279, 0
        %v310 = vsel %vm290, %v280, 0
        %v313 = vsel %vm290, %v281, 0
        %v316 = vsel %vm290, %v282, 0
        %v319 = vsel %vm290, %v283, 0
        %vm321 = vcmask 1043456
        %v323 = vsel %vm321, %v284, 0
        %325 = vmatprep.subr.bf16.mxu0 0
        %326 = vmatpush1.bf16.msra.mxu0 %v323
        %327 = vmatprep.subr.bf16.mxu0 0
        %328 = vmatpush1.bf16.msra.mxu0 0
        %329 = vmatprep.subr.bf16.mxu0 0
        %330 = vmatpush1.bf16.msra.mxu0 0
        %331 = vmatprep.subr.bf16.mxu0 0
        %332 = vmatpush1.bf16.msra.mxu0 0
        %333 = vmatprep.subr.bf16.mxu0 0
        %334 = vmatpush1.bf16.msra.mxu0 0
        %335 = vmatprep.subr.bf16.mxu0 0
        %336 = vmatpush1.bf16.msra.mxu0 0
        %337 = vmatprep.subr.bf16.mxu0 0
        %338 = vmatpush1.bf16.msra.mxu0 0
        %339 = vmatprep.subr.bf16.mxu0 0
        %340 = vmatpush1.bf16.msra.mxu0 0
        %341 = vmatprep.subr.bf16.mxu0 0
        %342 = vmatpush1.bf16.msra.mxu0 0
        %343 = vmatprep.subr.bf16.mxu0 0
        %344 = vmatpush1.bf16.msra.mxu0 0
        %345 = vmatprep.subr.bf16.mxu0 0
        %346 = vmatpush1.bf16.msra.mxu0 0
        %347 = vmatprep.subr.bf16.mxu0 0
        %348 = vmatpush1.bf16.msra.mxu0 0
        %349 = vmatprep.subr.bf16.mxu0 0
        %350 = vmatpush1.bf16.msra.mxu0 0
        %351 = vmatprep.subr.bf16.mxu0 0
        %352 = vmatpush1.bf16.msra.mxu0 0
        %353 = vmatprep.subr.bf16.mxu0 0
        %354 = vmatpush1.bf16.msra.mxu0 0
        %355 = vmatprep.subr.bf16.mxu0 0
        %356 = vmatpush1.bf16.msra.mxu0 0
        %357 = vmatprep.mubr.bf16.mxu0 0
        %358 = vmatmul.mubr.bf16.gmra.mrb[0].mxu0 %v292
        %v359 = vpop.f32.mrb[0].mxu0
        %v360 = vadd.f32 %v289, %v359
        %v361 = vpop.f32.mrb[0].mxu0
        %v362 = vpop.f32.mrb[0].mxu0
        %v363 = vadd.f32 %v289, %v362
        %v364 = vpop.f32.mrb[0].mxu0
        %365 = vmatprep.mubr.bf16.mxu0 0
        %366 = vmatmul.mubr.bf16.gmra.mrb[0].mxu0 %v295
        %v367 = vpop.f32.mrb[0].mxu0
        %v368 = vadd.f32 %v289, %v367
        %v369 = vpop.f32.mrb[0].mxu0
        %v370 = vpop.f32.mrb[0].mxu0
        %v371 = vadd.f32 %v289, %v370
        %v372 = vpop.f32.mrb[0].mxu0
        %373 = vmatprep.mubr.bf16.mxu0 0
        %374 = vmatmul.mubr.bf16.gmra.mrb[0].mxu0 %v298
        %v375 = vpop.f32.mrb[0].mxu0
        %v376 = vadd.f32 %v289, %v375
        %v377 = vpop.f32.mrb[0].mxu0
        %v378 = vpop.f32.mrb[0].mxu0
        %v379 = vadd.f32 %v289, %v378
        %v380 = vpop.f32.mrb[0].mxu0
        %381 = vmatprep.mubr.bf16.mxu0 0
        %382 = vmatmul.mubr.bf16.gmra.mrb[0].mxu0 %v301
        %v383 = vpop.f32.mrb[0].mxu0
        %v384 = vadd.f32 %v289, %v383
        %v385 = vpop.f32.mrb[0].mxu0
        %v386 = vpop.f32.mrb[0].mxu0
        %v387 = vadd.f32 %v289, %v386
        %v388 = vpop.f32.mrb[0].mxu0
        %389 = vmatprep.mubr.bf16.mxu0 0
        %390 = vmatmul.mubr.bf16.gmra.mrb[0].mxu0 %v304
        %v391 = vpop.f32.mrb[0].mxu0
        %v392 = vadd.f32 %v289, %v391
        %v393 = vpop.f32.mrb[0].mxu0
        %v394 = vpop.f32.mrb[0].mxu0
        %v395 = vadd.f32 %v289, %v394
        %v396 = vpop.f32.mrb[0].mxu0
        %397 = vmatprep.mubr.bf16.mxu0 0
        %398 = vmatmul.mubr.bf16.gmra.mrb[0].mxu0 %v307
        %v399 = vpop.f32.mrb[0].mxu0
        %v400 = vadd.f32 %v289, %v399
        %v401 = vpop.f32.mrb[0].mxu0
        %v402 = vpop.f32.mrb[0].mxu0
        %v403 = vadd.f32 %v289, %v402
        %v404 = vpop.f32.mrb[0].mxu0
        %405 = vmatprep.mubr.bf16.mxu0 0
        %406 = vmatmul.mubr.bf16.gmra.mrb[0].mxu0 %v310
        %v407 = vpop.f32.mrb[0].mxu0
        %v408 = vadd.f32 %v289, %v407
        %v409 = vpop.f32.mrb[0].mxu0
        %v410 = vpop.f32.mrb[0].mxu0
        %v411 = vadd.f32 %v289, %v410
        %v412 = vpop.f32.mrb[0].mxu0
        %413 = vmatprep.mubr.bf16.mxu0 0
        %414 = vmatmul.mubr.bf16.gmra.mrb[0].mxu0 %v313
        %v415 = vpop.f32.mrb[0].mxu0
        %v416 = vadd.f32 %v289, %v415
        %v417 = vpop.f32.mrb[0].mxu0
        %v418 = vpop.f32.mrb[0].mxu0
        %v419 = vadd.f32 %v289, %v418
        %v420 = vpop.f32.mrb[0].mxu0
        %421 = vmatprep.mubr.bf16.mxu0 0
        %422 = vmatmul.mubr.bf16.gmra.mrb[0].mxu0 %v316
        %v423 = vpop.f32.mrb[0].mxu0
        %v424 = vadd.f32 %v289, %v423
        %v425 = vpop.f32.mrb[0].mxu0
        %v426 = vpop.f32.mrb[0].mxu0
        %v427 = vadd.f32 %v289, %v426
        %v428 = vpop.f32.mrb[0].mxu0
        %429 = vmatprep.mubr.bf16.mxu0 0
        %430 = vmatmul.mubr.bf16.gmra.mrb[0].mxu0 %v319
        %v431 = vpop.f32.mrb[0].mxu0
        %v432 = vadd.f32 %v289, %v431
        %v433 = vpop.f32.mrb[0].mxu0
        %v434 = vpop.f32.mrb[0].mxu0
        %v435 = vadd.f32 %v289, %v434
        %v436 = vpop.f32.mrb[0].mxu0
        %437 = vdwg.mxu0
        %v438 = vpack.c.bf16 %v363, %v360
        %v439 = vpack.c.bf16 %v371, %v368
        %v440 = vpack.c.bf16 %v379, %v376
        %v441 = vpack.c.bf16 %v387, %v384
        %v442 = vpack.c.bf16 %v395, %v392
        %v443 = vpack.c.bf16 %v403, %v400
        %v444 = vpack.c.bf16 %v411, %v408
        %v445 = vpack.c.bf16 %v419, %v416
        %v446 = vpack.c.bf16 %v427, %v424
        %v447 = vpack.c.bf16 %v435, %v432
        %v448 = vld [vmem:[%s2] sm:$0xf]
        %v449 = vld [vmem:[%s2 + $0x4] sm:$0xf]
        %v450 = vld [vmem:[%s2 + $0x8] sm:$0xf]
        %v451 = vld [vmem:[%s2 + $0xc] sm:$0xf]
        %v452 = vld [vmem:[%s2 + $0x10] sm:$0xf]
        %v453 = vld [vmem:[%s2 + $0x14] sm:$0xf]
        %v454 = vld [vmem:[%s2 + $0x18] sm:$0xf]
        %v455 = vld [vmem:[%s2 + $0x1c] sm:$0xf]
        %v456 = vld [vmem:[%s2 + $0x20] sm:$0xf]
        %v457 = vld [vmem:[%s2 + $0x24] sm:$0xf]
        %v458 = vld [vmem:[%s2 + $0x28] sm:$0xf]
        %v459 = vld [vmem:[%s2 + $0x2c] sm:$0xf]
        %v460 = vld [vmem:[%s2 + $0x30] sm:$0xf]
        %v461 = vld [vmem:[%s2 + $0x34] sm:$0xf]
        %v462 = vld [vmem:[%s2 + $0x38] sm:$0xf]
        %v463 = vld [vmem:[%s2 + $0x3c] sm:$0xf]
        %v464 = vld [vmem:[%s3 + $0x1] sm:$0x1]
        %v465 = vlaneseq
        %v466 = vshrl.u32 %v465, 7
        %v467 = vsub.s32 0, %v466
        %v468 = vrot.slane %v464, %v467
        %v485 = vunpack.c.l.b16 %v448
        %v486 = vunpack.c.l.b16 %v449
        %v487 = vunpack.c.l.b16 %v450
        %v488 = vunpack.c.l.b16 %v451
        %v489 = vunpack.c.l.b16 %v452
        %v490 = vunpack.c.l.b16 %v453
        %v491 = vunpack.c.l.b16 %v454
        %v492 = vunpack.c.l.b16 %v455
        %v493 = vunpack.c.l.b16 %v456
        %v494 = vunpack.c.l.b16 %v457
        %v495 = vunpack.c.l.b16 %v458
        %v496 = vunpack.c.l.b16 %v459
        %v497 = vunpack.c.l.b16 %v460
        %v498 = vunpack.c.l.b16 %v461
        %v499 = vunpack.c.l.b16 %v462
        %v500 = vunpack.c.l.b16 %v463
        %v501 = vpack.c.b16 %v486, %v485
        %v502 = vpack.c.b16 %v488, %v487
        %v503 = vpack.c.b16 %v490, %v489
        %v504 = vpack.c.b16 %v492, %v491
        %v505 = vpack.c.b16 %v494, %v493
        %v506 = vpack.c.b16 %v496, %v495
        %v507 = vpack.c.b16 %v498, %v497
        %v508 = vpack.c.b16 %v500, %v499
        %517 = vmatprep.subr.bf16.mxu0 0
        %518 = vmatpush1.bf16.msra.mxu0 %v501
        %519 = vmatprep.subr.bf16.mxu0 0
        %520 = vmatpush1.bf16.msra.mxu0 %v502
        %521 = vmatprep.subr.bf16.mxu0 0
        %522 = vmatpush1.bf16.msra.mxu0 %v503
        %523 = vmatprep.subr.bf16.mxu0 0
        %524 = vmatpush1.bf16.msra.mxu0 %v504
        %525 = vmatprep.subr.bf16.mxu0 0
        %526 = vmatpush1.bf16.msra.mxu0 %v505
        %527 = vmatprep.subr.bf16.mxu0 0
        %528 = vmatpush1.bf16.msra.mxu0 %v506
        %529 = vmatprep.subr.bf16.mxu0 0
        %530 = vmatpush1.bf16.msra.mxu0 %v507
        %531 = vmatprep.subr.bf16.mxu0 0
        %532 = vmatpush1.bf16.msra.mxu0 %v508
        %533 = vmatprep.subr.bf16.mxu0 0
        %534 = vmatpush1.bf16.msra.mxu0 0
        %535 = vmatprep.subr.bf16.mxu0 0
        %536 = vmatpush1.bf16.msra.mxu0 0
        %537 = vmatprep.subr.bf16.mxu0 0
        %538 = vmatpush1.bf16.msra.mxu0 0
        %539 = vmatprep.subr.bf16.mxu0 0
        %540 = vmatpush1.bf16.msra.mxu0 0
        %541 = vmatprep.subr.bf16.mxu0 0
        %542 = vmatpush1.bf16.msra.mxu0 0
        %543 = vmatprep.subr.bf16.mxu0 0
        %544 = vmatpush1.bf16.msra.mxu0 0
        %545 = vmatprep.subr.bf16.mxu0 0
        %546 = vmatpush1.bf16.msra.mxu0 0
        %547 = vmatprep.subr.bf16.mxu0 0
        %548 = vmatpush1.bf16.msra.mxu0 0
        %549 = vmatprep.mubr.bf16.mxu0 0
        %550 = vmatmul.mubr.bf16.gmra.mrb[0].mxu0 %v438
        %v551 = vpop.f32.mrb[0].mxu0
        %v552 = vadd.f32 %v468, %v551
        %v553 = vpop.f32.mrb[0].mxu0
        %v554 = vpop.f32.mrb[0].mxu0
        %v555 = vadd.f32 %v468, %v554
        %v556 = vpop.f32.mrb[0].mxu0
        %557 = vmatprep.mubr.bf16.mxu0 0
        %558 = vmatmul.mubr.bf16.gmra.mrb[0].mxu0 %v439
        %v559 = vpop.f32.mrb[0].mxu0
        %v560 = vadd.f32 %v468, %v559
        %v561 = vpop.f32.mrb[0].mxu0
        %v562 = vpop.f32.mrb[0].mxu0
        %v563 = vadd.f32 %v468, %v562
        %v564 = vpop.f32.mrb[0].mxu0
        %565 = vmatprep.mubr.bf16.mxu0 0
        %566 = vmatmul.mubr.bf16.gmra.mrb[0].mxu0 %v440
        %v567 = vpop.f32.mrb[0].mxu0
        %v568 = vadd.f32 %v468, %v567
        %v569 = vpop.f32.mrb[0].mxu0
        %v570 = vpop.f32.mrb[0].mxu0
        %v571 = vadd.f32 %v468, %v570
        %v572 = vpop.f32.mrb[0].mxu0
        %573 = vmatprep.mubr.bf16.mxu0 0
        %574 = vmatmul.mubr.bf16.gmra.mrb[0].mxu0 %v441
        %v575 = vpop.f32.mrb[0].mxu0
        %v576 = vadd.f32 %v468, %v575
        %v577 = vpop.f32.mrb[0].mxu0
        %v578 = vpop.f32.mrb[0].mxu0
        %v579 = vadd.f32 %v468, %v578
        %v580 = vpop.f32.mrb[0].mxu0
        %581 = vmatprep.mubr.bf16.mxu0 0
        %582 = vmatmul.mubr.bf16.gmra.mrb[0].mxu0 %v442
        %v583 = vpop.f32.mrb[0].mxu0
        %v584 = vadd.f32 %v468, %v583
        %v585 = vpop.f32.mrb[0].mxu0
        %v586 = vpop.f32.mrb[0].mxu0
        %v587 = vadd.f32 %v468, %v586
        %v588 = vpop.f32.mrb[0].mxu0
        %589 = vmatprep.mubr.bf16.mxu0 0
        %590 = vmatmul.mubr.bf16.gmra.mrb[0].mxu0 %v443
        %v591 = vpop.f32.mrb[0].mxu0
        %v592 = vadd.f32 %v468, %v591
        %v593 = vpop.f32.mrb[0].mxu0
        %v594 = vpop.f32.mrb[0].mxu0
        %v595 = vadd.f32 %v468, %v594
        %v596 = vpop.f32.mrb[0].mxu0
        %597 = vmatprep.mubr.bf16.mxu0 0
        %598 = vmatmul.mubr.bf16.gmra.mrb[0].mxu0 %v444
        %v599 = vpop.f32.mrb[0].mxu0
        %v600 = vadd.f32 %v468, %v599
        %v601 = vpop.f32.mrb[0].mxu0
        %v602 = vpop.f32.mrb[0].mxu0
        %v603 = vadd.f32 %v468, %v602
        %v604 = vpop.f32.mrb[0].mxu0
        %605 = vmatprep.mubr.bf16.mxu0 0
        %606 = vmatmul.mubr.bf16.gmra.mrb[0].mxu0 %v445
        %v607 = vpop.f32.mrb[0].mxu0
        %v608 = vadd.f32 %v468, %v607
        %v609 = vpop.f32.mrb[0].mxu0
        %v610 = vpop.f32.mrb[0].mxu0
        %v611 = vadd.f32 %v468, %v610
        %v612 = vpop.f32.mrb[0].mxu0
        %613 = vmatprep.mubr.bf16.mxu0 0
        %614 = vmatmul.mubr.bf16.gmra.mrb[0].mxu0 %v446
        %v615 = vpop.f32.mrb[0].mxu0
        %v616 = vadd.f32 %v468, %v615
        %v617 = vpop.f32.mrb[0].mxu0
        %v618 = vpop.f32.mrb[0].mxu0
        %v619 = vadd.f32 %v468, %v618
        %v620 = vpop.f32.mrb[0].mxu0
        %621 = vmatprep.mubr.bf16.mxu0 0
        %622 = vmatmul.mubr.bf16.gmra.mrb[0].mxu0 %v447
        %v623 = vpop.f32.mrb[0].mxu0
        %v624 = vadd.f32 %v468, %v623
        %v625 = vpop.f32.mrb[0].mxu0
        %v626 = vpop.f32.mrb[0].mxu0
        %v627 = vadd.f32 %v468, %v626
        %v628 = vpop.f32.mrb[0].mxu0
        %629 = vdwg.mxu0
        %v630 = vld [vmem:[%s3 + $0x2] sm:$0x1]
        %v631 = vld [vmem:[%s3 + $0x3] sm:$0x1]
        %v632 = vld [vmem:[%s3 + $0x4] sm:$0x1]
        %v633 = vlaneseq
        %v634 = vshrl.u32 %v633, 7
        %v635 = vsub.s32 0, %v634
        %v636 = vrot.slane %v630, %v635
        %v637 = vmul.f32 %v552, %v636
        %v638 = vmul.f32 %v555, %v636
        %v639 = vmul.f32 %v560, %v636
        %v640 = vmul.f32 %v563, %v636
        %v641 = vmul.f32 %v568, %v636
        %v642 = vmul.f32 %v571, %v636
        %v643 = vmul.f32 %v576, %v636
        %v644 = vmul.f32 %v579, %v636
        %v645 = vmul.f32 %v584, %v636
        %v646 = vmul.f32 %v587, %v636
        %v647 = vmul.f32 %v592, %v636
        %v648 = vmul.f32 %v595, %v636
        %v649 = vmul.f32 %v600, %v636
        %v650 = vmul.f32 %v603, %v636
        %v651 = vmul.f32 %v608, %v636
        %v652 = vmul.f32 %v611, %v636
        %v653 = vmul.f32 %v616, %v636
        %v654 = vmul.f32 %v619, %v636
        %v655 = vmul.f32 %v624, %v636
        %v656 = vmul.f32 %v627, %v636
        %v657 = vlaneseq
        %v658 = vshrl.u32 %v657, 7
        %v659 = vsub.s32 0, %v658
        %v660 = vrot.slane %v631, %v659
        %v661 = vmul.f32 %v552, %v660
        %v662 = vmul.f32 %v555, %v660
        %v663 = vmul.f32 %v560, %v660
        %v664 = vmul.f32 %v563, %v660
        %v665 = vmul.f32 %v568, %v660
        %v666 = vmul.f32 %v571, %v660
        %v667 = vmul.f32 %v576, %v660
        %v668 = vmul.f32 %v579, %v660
        %v669 = vmul.f32 %v584, %v660
        %v670 = vmul.f32 %v587, %v660
        %v671 = vmul.f32 %v592, %v660
        %v672 = vmul.f32 %v595, %v660
        %v673 = vmul.f32 %v600, %v660
        %v674 = vmul.f32 %v603, %v660
        %v675 = vmul.f32 %v608, %v660
        %v676 = vmul.f32 %v611, %v660
        %v677 = vmul.f32 %v616, %v660
        %v678 = vmul.f32 %v619, %v660
        %v679 = vmul.f32 %v624, %v660
        %v680 = vmul.f32 %v627, %v660
        %v681 = vlaneseq
        %v682 = vshrl.u32 %v681, 7
        %v683 = vsub.s32 0, %v682
        %v684 = vrot.slane %v632, %v683
        %v685 = vmul.f32 %v684, %v552
        %v686 = vmul.f32 %v684, %v555
        %v687 = vmul.f32 %v684, %v560
        %v688 = vmul.f32 %v684, %v563
        %v689 = vmul.f32 %v684, %v568
        %v690 = vmul.f32 %v684, %v571
        %v691 = vmul.f32 %v684, %v576
        %v692 = vmul.f32 %v684, %v579
        %v693 = vmul.f32 %v684, %v584
        %v694 = vmul.f32 %v684, %v587
        %v695 = vmul.f32 %v684, %v592
        %v696 = vmul.f32 %v684, %v595
        %v697 = vmul.f32 %v684, %v600
        %v698 = vmul.f32 %v684, %v603
        %v699 = vmul.f32 %v684, %v608
        %v700 = vmul.f32 %v684, %v611
        %v701 = vmul.f32 %v684, %v616
        %v702 = vmul.f32 %v684, %v619
        %v703 = vmul.f32 %v684, %v624
        %v704 = vmul.f32 %v684, %v627
        %v705 = vtanh.pop %v685
        %v706 = vtanh.pop %v686
        %v707 = vtanh.pop %v687
        %v708 = vtanh.pop %v688
        %v709 = vtanh.pop %v689
        %v710 = vtanh.pop %v690
        %v711 = vtanh.pop %v691
        %v712 = vtanh.pop %v692
        %v713 = vtanh.pop %v693
        %v714 = vtanh.pop %v694
        %v715 = vtanh.pop %v695
        %v716 = vtanh.pop %v696
        %v717 = vtanh.pop %v697
        %v718 = vtanh.pop %v698
        %v719 = vtanh.pop %v699
        %v720 = vtanh.pop %v700
        %v721 = vtanh.pop %v701
        %v722 = vtanh.pop %v702
        %v723 = vtanh.pop %v703
        %v724 = vtanh.pop %v704
        %v725 = vmul.f32 %v661, %v705
        %v726 = vmul.f32 %v662, %v706
        %v727 = vmul.f32 %v663, %v707
        %v728 = vmul.f32 %v664, %v708
        %v729 = vmul.f32 %v665, %v709
        %v730 = vmul.f32 %v666, %v710
        %v731 = vmul.f32 %v667, %v711
        %v732 = vmul.f32 %v668, %v712
        %v733 = vmul.f32 %v669, %v713
        %v734 = vmul.f32 %v670, %v714
        %v735 = vmul.f32 %v671, %v715
        %v736 = vmul.f32 %v672, %v716
        %v737 = vmul.f32 %v673, %v717
        %v738 = vmul.f32 %v674, %v718
        %v739 = vmul.f32 %v675, %v719
        %v740 = vmul.f32 %v676, %v720
        %v741 = vmul.f32 %v677, %v721
        %v742 = vmul.f32 %v678, %v722
        %v743 = vmul.f32 %v679, %v723
        %v744 = vmul.f32 %v680, %v724
        %v745 = vadd.f32 %v637, %v725
        %v746 = vadd.f32 %v638, %v726
        %v747 = vadd.f32 %v639, %v727
        %v748 = vadd.f32 %v640, %v728
        %v749 = vadd.f32 %v641, %v729
        %v750 = vadd.f32 %v642, %v730
        %v751 = vadd.f32 %v643, %v731
        %v752 = vadd.f32 %v644, %v732
        %v753 = vadd.f32 %v645, %v733
        %v754 = vadd.f32 %v646, %v734
        %v755 = vadd.f32 %v647, %v735
        %v756 = vadd.f32 %v648, %v736
        %v757 = vadd.f32 %v649, %v737
        %v758 = vadd.f32 %v650, %v738
        %v759 = vadd.f32 %v651, %v739
        %v760 = vadd.f32 %v652, %v740
        %v761 = vadd.f32 %v653, %v741
        %v762 = vadd.f32 %v654, %v742
        %v763 = vadd.f32 %v655, %v743
        %v764 = vadd.f32 %v656, %v744
        %v765 = vpack.c.bf16 %v746, %v745
        %v766 = vpack.c.bf16 %v748, %v747
        %v767 = vpack.c.bf16 %v750, %v749
        %v768 = vpack.c.bf16 %v752, %v751
        %v769 = vpack.c.bf16 %v754, %v753
        %v770 = vpack.c.bf16 %v756, %v755
        %v771 = vpack.c.bf16 %v758, %v757
        %v772 = vpack.c.bf16 %v760, %v759
        %v773 = vpack.c.bf16 %v762, %v761
        %v774 = vpack.c.bf16 %v764, %v763
        %s775 = scalar_lea.vmem %s2, 64
        %v776 = vld [vmem:[%s775] sm:$0xf]
        %v777 = vld [vmem:[%s775 + $0x4] sm:$0xf]
        %v778 = vld [vmem:[%s775 + $0x8] sm:$0xf]
        %v779 = vld [vmem:[%s775 + $0xc] sm:$0xf]
        %v780 = vld [vmem:[%s775 + $0x10] sm:$0xf]
        %v781 = vld [vmem:[%s775 + $0x14] sm:$0xf]
        %v782 = vld [vmem:[%s775 + $0x18] sm:$0xf]
        %v783 = vld [vmem:[%s775 + $0x1c] sm:$0xf]
        %v784 = vld [vmem:[%s775 + $0x20] sm:$0xf]
        %v785 = vld [vmem:[%s775 + $0x24] sm:$0xf]
        %v786 = vld [vmem:[%s775 + $0x28] sm:$0xf]
        %v787 = vld [vmem:[%s775 + $0x2c] sm:$0xf]
        %v788 = vld [vmem:[%s775 + $0x30] sm:$0xf]
        %v789 = vld [vmem:[%s775 + $0x34] sm:$0xf]
        %v790 = vld [vmem:[%s775 + $0x38] sm:$0xf]
        %v791 = vld [vmem:[%s775 + $0x3c] sm:$0xf]
        %v792 = vld [vmem:[%s3 + $0x5] sm:$0x1]
        %v793 = vlaneseq
        %v794 = vshrl.u32 %v793, 7
        %v795 = vsub.s32 0, %v794
        %v796 = vrot.slane %v792, %v795
        %v813 = vunpack.c.l.b16 %v776
        %v814 = vunpack.c.l.b16 %v777
        %v815 = vunpack.c.l.b16 %v778
        %v816 = vunpack.c.l.b16 %v779
        %v817 = vunpack.c.l.b16 %v780
        %v818 = vunpack.c.l.b16 %v781
        %v819 = vunpack.c.l.b16 %v782
        %v820 = vunpack.c.l.b16 %v783
        %v821 = vunpack.c.l.b16 %v784
        %v822 = vunpack.c.l.b16 %v785
        %v823 = vunpack.c.l.b16 %v786
        %v824 = vunpack.c.l.b16 %v787
        %v825 = vunpack.c.l.b16 %v788
        %v826 = vunpack.c.l.b16 %v789
        %v827 = vunpack.c.l.b16 %v790
        %v828 = vunpack.c.l.b16 %v791
        %v829 = vpack.c.b16 %v814, %v813
        %v830 = vpack.c.b16 %v816, %v815
        %v831 = vpack.c.b16 %v818, %v817
        %v832 = vpack.c.b16 %v820, %v819
        %v833 = vpack.c.b16 %v822, %v821
        %v834 = vpack.c.b16 %v824, %v823
        %v835 = vpack.c.b16 %v826, %v825
        %v836 = vpack.c.b16 %v828, %v827
        %845 = vmatprep.subr.bf16.mxu0 0
        %846 = vmatpush1.bf16.msra.mxu0 %v829
        %847 = vmatprep.subr.bf16.mxu0 0
        %848 = vmatpush1.bf16.msra.mxu0 %v830
        %849 = vmatprep.subr.bf16.mxu0 0
        %850 = vmatpush1.bf16.msra.mxu0 %v831
        %851 = vmatprep.subr.bf16.mxu0 0
        %852 = vmatpush1.bf16.msra.mxu0 %v832
        %853 = vmatprep.subr.bf16.mxu0 0
        %854 = vmatpush1.bf16.msra.mxu0 %v833
        %855 = vmatprep.subr.bf16.mxu0 0
        %856 = vmatpush1.bf16.msra.mxu0 %v834
        %857 = vmatprep.subr.bf16.mxu0 0
        %858 = vmatpush1.bf16.msra.mxu0 %v835
        %859 = vmatprep.subr.bf16.mxu0 0
        %860 = vmatpush1.bf16.msra.mxu0 %v836
        %861 = vmatprep.subr.bf16.mxu0 0
        %862 = vmatpush1.bf16.msra.mxu0 0
        %863 = vmatprep.subr.bf16.mxu0 0
        %864 = vmatpush1.bf16.msra.mxu0 0
        %865 = vmatprep.subr.bf16.mxu0 0
        %866 = vmatpush1.bf16.msra.mxu0 0
        %867 = vmatprep.subr.bf16.mxu0 0
        %868 = vmatpush1.bf16.msra.mxu0 0
        %869 = vmatprep.subr.bf16.mxu0 0
        %870 = vmatpush1.bf16.msra.mxu0 0
        %871 = vmatprep.subr.bf16.mxu0 0
        %872 = vmatpush1.bf16.msra.mxu0 0
        %873 = vmatprep.subr.bf16.mxu0 0
        %874 = vmatpush1.bf16.msra.mxu0 0
        %875 = vmatprep.subr.bf16.mxu0 0
        %876 = vmatpush1.bf16.msra.mxu0 0
        %877 = vmatprep.mubr.bf16.mxu0 0
        %878 = vmatmul.mubr.bf16.gmra.mrb[0].mxu0 %v765
        %v879 = vpop.f32.mrb[0].mxu0
        %v880 = vadd.f32 %v796, %v879
        %v881 = vpop.f32.mrb[0].mxu0
        %v882 = vpop.f32.mrb[0].mxu0
        %v883 = vadd.f32 %v796, %v882
        %v884 = vpop.f32.mrb[0].mxu0
        %885 = vmatprep.mubr.bf16.mxu0 0
        %886 = vmatmul.mubr.bf16.gmra.mrb[0].mxu0 %v766
        %v887 = vpop.f32.mrb[0].mxu0
        %v888 = vadd.f32 %v796, %v887
        %v889 = vpop.f32.mrb[0].mxu0
        %v890 = vpop.f32.mrb[0].mxu0
        %v891 = vadd.f32 %v796, %v890
        %v892 = vpop.f32.mrb[0].mxu0
        %893 = vmatprep.mubr.bf16.mxu0 0
        %894 = vmatmul.mubr.bf16.gmra.mrb[0].mxu0 %v767
        %v895 = vpop.f32.mrb[0].mxu0
        %v896 = vadd.f32 %v796, %v895
        %v897 = vpop.f32.mrb[0].mxu0
        %v898 = vpop.f32.mrb[0].mxu0
        %v899 = vadd.f32 %v796, %v898
        %v900 = vpop.f32.mrb[0].mxu0
        %901 = vmatprep.mubr.bf16.mxu0 0
        %902 = vmatmul.mubr.bf16.gmra.mrb[0].mxu0 %v768
        %v903 = vpop.f32.mrb[0].mxu0
        %v904 = vadd.f32 %v796, %v903
        %v905 = vpop.f32.mrb[0].mxu0
        %v906 = vpop.f32.mrb[0].mxu0
        %v907 = vadd.f32 %v796, %v906
        %v908 = vpop.f32.mrb[0].mxu0
        %909 = vmatprep.mubr.bf16.mxu0 0
        %910 = vmatmul.mubr.bf16.gmra.mrb[0].mxu0 %v769
        %v911 = vpop.f32.mrb[0].mxu0
        %v912 = vadd.f32 %v796, %v911
        %v913 = vpop.f32.mrb[0].mxu0
        %v914 = vpop.f32.mrb[0].mxu0
        %v915 = vadd.f32 %v796, %v914
        %v916 = vpop.f32.mrb[0].mxu0
        %917 = vmatprep.mubr.bf16.mxu0 0
        %918 = vmatmul.mubr.bf16.gmra.mrb[0].mxu0 %v770
        %v919 = vpop.f32.mrb[0].mxu0
        %v920 = vadd.f32 %v796, %v919
        %v921 = vpop.f32.mrb[0].mxu0
        %v922 = vpop.f32.mrb[0].mxu0
        %v923 = vadd.f32 %v796, %v922
        %v924 = vpop.f32.mrb[0].mxu0
        %925 = vmatprep.mubr.bf16.mxu0 0
        %926 = vmatmul.mubr.bf16.gmra.mrb[0].mxu0 %v771
        %v927 = vpop.f32.mrb[0].mxu0
        %v928 = vadd.f32 %v796, %v927
        %v929 = vpop.f32.mrb[0].mxu0
        %v930 = vpop.f32.mrb[0].mxu0
        %v931 = vadd.f32 %v796, %v930
        %v932 = vpop.f32.mrb[0].mxu0
        %933 = vmatprep.mubr.bf16.mxu0 0
        %934 = vmatmul.mubr.bf16.gmra.mrb[0].mxu0 %v772
        %v935 = vpop.f32.mrb[0].mxu0
        %v936 = vadd.f32 %v796, %v935
        %v937 = vpop.f32.mrb[0].mxu0
        %v938 = vpop.f32.mrb[0].mxu0
        %v939 = vadd.f32 %v796, %v938
        %v940 = vpop.f32.mrb[0].mxu0
        %941 = vmatprep.mubr.bf16.mxu0 0
        %942 = vmatmul.mubr.bf16.gmra.mrb[0].mxu0 %v773
        %v943 = vpop.f32.mrb[0].mxu0
        %v944 = vadd.f32 %v796, %v943
        %v945 = vpop.f32.mrb[0].mxu0
        %v946 = vpop.f32.mrb[0].mxu0
        %v947 = vadd.f32 %v796, %v946
        %v948 = vpop.f32.mrb[0].mxu0
        %949 = vmatprep.mubr.bf16.mxu0 0
        %950 = vmatmul.mubr.bf16.gmra.mrb[0].mxu0 %v774
        %v951 = vpop.f32.mrb[0].mxu0
        %v952 = vadd.f32 %v796, %v951
        %v953 = vpop.f32.mrb[0].mxu0
        %v954 = vpop.f32.mrb[0].mxu0
        %v955 = vadd.f32 %v796, %v954
        %v956 = vpop.f32.mrb[0].mxu0
        %957 = vdwg.mxu0
        %v958 = vld [vmem:[%s3 + $0x6] sm:$0x1]
        %v959 = vld [vmem:[%s3 + $0x7] sm:$0x1]
        %v960 = vld [vmem:[%s3 + $0x8] sm:$0x1]
        %v961 = vlaneseq
        %v962 = vshrl.u32 %v961, 7
        %v963 = vsub.s32 0, %v962
        %v964 = vrot.slane %v958, %v963
        %v965 = vmul.f32 %v880, %v964
        %v966 = vmul.f32 %v883, %v964
        %v967 = vmul.f32 %v888, %v964
        %v968 = vmul.f32 %v891, %v964
        %v969 = vmul.f32 %v896, %v964
        %v970 = vmul.f32 %v899, %v964
        %v971 = vmul.f32 %v904, %v964
        %v972 = vmul.f32 %v907, %v964
        %v973 = vmul.f32 %v912, %v964
        %v974 = vmul.f32 %v915, %v964
        %v975 = vmul.f32 %v920, %v964
        %v976 = vmul.f32 %v923, %v964
        %v977 = vmul.f32 %v928, %v964
        %v978 = vmul.f32 %v931, %v964
        %v979 = vmul.f32 %v936, %v964
        %v980 = vmul.f32 %v939, %v964
        %v981 = vmul.f32 %v944, %v964
        %v982 = vmul.f32 %v947, %v964
        %v983 = vmul.f32 %v952, %v964
        %v984 = vmul.f32 %v955, %v964
        %v985 = vlaneseq
        %v986 = vshrl.u32 %v985, 7
        %v987 = vsub.s32 0, %v986
        %v988 = vrot.slane %v959, %v987
        %v989 = vmul.f32 %v880, %v988
        %v990 = vmul.f32 %v883, %v988
        %v991 = vmul.f32 %v888, %v988
        %v992 = vmul.f32 %v891, %v988
        %v993 = vmul.f32 %v896, %v988
        %v994 = vmul.f32 %v899, %v988
        %v995 = vmul.f32 %v904, %v988
        %v996 = vmul.f32 %v907, %v988
        %v997 = vmul.f32 %v912, %v988
        %v998 = vmul.f32 %v915, %v988
        %v999 = vmul.f32 %v920, %v988
        %v1000 = vmul.f32 %v923, %v988
        %v1001 = vmul.f32 %v928, %v988
        %v1002 = vmul.f32 %v931, %v988
        %v1003 = vmul.f32 %v936, %v988
        %v1004 = vmul.f32 %v939, %v988
        %v1005 = vmul.f32 %v944, %v988
        %v1006 = vmul.f32 %v947, %v988
        %v1007 = vmul.f32 %v952, %v988
        %v1008 = vmul.f32 %v955, %v988
        %v1009 = vlaneseq
        %v1010 = vshrl.u32 %v1009, 7
        %v1011 = vsub.s32 0, %v1010
        %v1012 = vrot.slane %v960, %v1011
        %v1013 = vmul.f32 %v1012, %v880
        %v1014 = vmul.f32 %v1012, %v883
        %v1015 = vmul.f32 %v1012, %v888
        %v1016 = vmul.f32 %v1012, %v891
        %v1017 = vmul.f32 %v1012, %v896
        %v1018 = vmul.f32 %v1012, %v899
        %v1019 = vmul.f32 %v1012, %v904
        %v1020 = vmul.f32 %v1012, %v907
        %v1021 = vmul.f32 %v1012, %v912
        %v1022 = vmul.f32 %v1012, %v915
        %v1023 = vmul.f32 %v1012, %v920
        %v1024 = vmul.f32 %v1012, %v923
        %v1025 = vmul.f32 %v1012, %v928
        %v1026 = vmul.f32 %v1012, %v931
        %v1027 = vmul.f32 %v1012, %v936
        %v1028 = vmul.f32 %v1012, %v939
        %v1029 = vmul.f32 %v1012, %v944
        %v1030 = vmul.f32 %v1012, %v947
        %v1031 = vmul.f32 %v1012, %v952
        %v1032 = vmul.f32 %v1012, %v955
        %v1033 = vtanh.pop %v1013
        %v1034 = vtanh.pop %v1014
        %v1035 = vtanh.pop %v1015
        %v1036 = vtanh.pop %v1016
        %v1037 = vtanh.pop %v1017
        %v1038 = vtanh.pop %v1018
        %v1039 = vtanh.pop %v1019
        %v1040 = vtanh.pop %v1020
        %v1041 = vtanh.pop %v1021
        %v1042 = vtanh.pop %v1022
        %v1043 = vtanh.pop %v1023
        %v1044 = vtanh.pop %v1024
        %v1045 = vtanh.pop %v1025
        %v1046 = vtanh.pop %v1026
        %v1047 = vtanh.pop %v1027
        %v1048 = vtanh.pop %v1028
        %v1049 = vtanh.pop %v1029
        %v1050 = vtanh.pop %v1030
        %v1051 = vtanh.pop %v1031
        %v1052 = vtanh.pop %v1032
        %v1053 = vmul.f32 %v989, %v1033
        %v1054 = vmul.f32 %v990, %v1034
        %v1055 = vmul.f32 %v991, %v1035
        %v1056 = vmul.f32 %v992, %v1036
        %v1057 = vmul.f32 %v993, %v1037
        %v1058 = vmul.f32 %v994, %v1038
        %v1059 = vmul.f32 %v995, %v1039
        %v1060 = vmul.f32 %v996, %v1040
        %v1061 = vmul.f32 %v997, %v1041
        %v1062 = vmul.f32 %v998, %v1042
        %v1063 = vmul.f32 %v999, %v1043
        %v1064 = vmul.f32 %v1000, %v1044
        %v1065 = vmul.f32 %v1001, %v1045
        %v1066 = vmul.f32 %v1002, %v1046
        %v1067 = vmul.f32 %v1003, %v1047
        %v1068 = vmul.f32 %v1004, %v1048
        %v1069 = vmul.f32 %v1005, %v1049
        %v1070 = vmul.f32 %v1006, %v1050
        %v1071 = vmul.f32 %v1007, %v1051
        %v1072 = vmul.f32 %v1008, %v1052
        %v1073 = vadd.f32 %v965, %v1053
        %v1074 = vadd.f32 %v966, %v1054
        %v1075 = vadd.f32 %v967, %v1055
        %v1076 = vadd.f32 %v968, %v1056
        %v1077 = vadd.f32 %v969, %v1057
        %v1078 = vadd.f32 %v970, %v1058
        %v1079 = vadd.f32 %v971, %v1059
        %v1080 = vadd.f32 %v972, %v1060
        %v1081 = vadd.f32 %v973, %v1061
        %v1082 = vadd.f32 %v974, %v1062
        %v1083 = vadd.f32 %v975, %v1063
        %v1084 = vadd.f32 %v976, %v1064
        %v1085 = vadd.f32 %v977, %v1065
        %v1086 = vadd.f32 %v978, %v1066
        %v1087 = vadd.f32 %v979, %v1067
        %v1088 = vadd.f32 %v980, %v1068
        %v1089 = vadd.f32 %v981, %v1069
        %v1090 = vadd.f32 %v982, %v1070
        %v1091 = vadd.f32 %v983, %v1071
        %v1092 = vadd.f32 %v984, %v1072
        %v1093 = vadd.f32 %v1073, %v360
        %v1094 = vadd.f32 %v1074, %v363
        %v1095 = vadd.f32 %v1075, %v368
        %v1096 = vadd.f32 %v1076, %v371
        %v1097 = vadd.f32 %v1077, %v376
        %v1098 = vadd.f32 %v1078, %v379
        %v1099 = vadd.f32 %v1079, %v384
        %v1100 = vadd.f32 %v1080, %v387
        %v1101 = vadd.f32 %v1081, %v392
        %v1102 = vadd.f32 %v1082, %v395
        %v1103 = vadd.f32 %v1083, %v400
        %v1104 = vadd.f32 %v1084, %v403
        %v1105 = vadd.f32 %v1085, %v408
        %v1106 = vadd.f32 %v1086, %v411
        %v1107 = vadd.f32 %v1087, %v416
        %v1108 = vadd.f32 %v1088, %v419
        %v1109 = vadd.f32 %v1089, %v424
        %v1110 = vadd.f32 %v1090, %v427
        %v1111 = vadd.f32 %v1091, %v432
        %v1112 = vadd.f32 %v1092, %v435
        %v1113 = vtanh.pop %v1093
        %v1114 = vtanh.pop %v1094
        %v1115 = vtanh.pop %v1095
        %v1116 = vtanh.pop %v1096
        %v1117 = vtanh.pop %v1097
        %v1118 = vtanh.pop %v1098
        %v1119 = vtanh.pop %v1099
        %v1120 = vtanh.pop %v1100
        %v1121 = vtanh.pop %v1101
        %v1122 = vtanh.pop %v1102
        %v1123 = vtanh.pop %v1103
        %v1124 = vtanh.pop %v1104
        %v1125 = vtanh.pop %v1105
        %v1126 = vtanh.pop %v1106
        %v1127 = vtanh.pop %v1107
        %v1128 = vtanh.pop %v1108
        %v1129 = vtanh.pop %v1109
        %v1130 = vtanh.pop %v1110
        %v1131 = vtanh.pop %v1111
        %v1132 = vtanh.pop %v1112
        %v1133 = vpack.c.bf16 %v1114, %v1113
        %v1134 = vpack.c.bf16 %v1116, %v1115
        %v1135 = vpack.c.bf16 %v1118, %v1117
        %v1136 = vpack.c.bf16 %v1120, %v1119
        %v1137 = vpack.c.bf16 %v1122, %v1121
        %v1138 = vpack.c.bf16 %v1124, %v1123
        %v1139 = vpack.c.bf16 %v1126, %v1125
        %v1140 = vpack.c.bf16 %v1128, %v1127
        %v1141 = vpack.c.bf16 %v1130, %v1129
        %v1142 = vpack.c.bf16 %v1132, %v1131
        %s1143 = scalar_lea.vmem %s2, 128
        %v1144 = vld [vmem:[%s1143] sm:$0xf]
        %v1145 = vld [vmem:[%s1143 + $0x4] sm:$0xf]
        %v1146 = vld [vmem:[%s1143 + $0x8] sm:$0xf]
        %v1147 = vld [vmem:[%s1143 + $0xc] sm:$0xf]
        %v1148 = vld [vmem:[%s1143 + $0x10] sm:$0xf]
        %v1149 = vld [vmem:[%s1143 + $0x14] sm:$0xf]
        %v1150 = vld [vmem:[%s1143 + $0x18] sm:$0xf]
        %v1151 = vld [vmem:[%s1143 + $0x1c] sm:$0xf]
        %v1152 = vld [vmem:[%s1143 + $0x20] sm:$0xf]
        %v1153 = vld [vmem:[%s1143 + $0x24] sm:$0xf]
        %v1154 = vld [vmem:[%s1143 + $0x28] sm:$0xf]
        %v1155 = vld [vmem:[%s1143 + $0x2c] sm:$0xf]
        %v1156 = vld [vmem:[%s1143 + $0x30] sm:$0xf]
        %v1157 = vld [vmem:[%s1143 + $0x34] sm:$0xf]
        %v1158 = vld [vmem:[%s1143 + $0x38] sm:$0xf]
        %v1159 = vld [vmem:[%s1143 + $0x3c] sm:$0xf]
        %v1160 = vld [vmem:[%s3 + $0x9] sm:$0x1]
        %v1161 = vlaneseq
        %v1162 = vshrl.u32 %v1161, 7
        %v1163 = vsub.s32 0, %v1162
        %v1164 = vrot.slane %v1160, %v1163
        %v1181 = vunpack.c.l.b16 %v1144
        %v1182 = vunpack.c.l.b16 %v1145
        %v1183 = vunpack.c.l.b16 %v1146
        %v1184 = vunpack.c.l.b16 %v1147
        %v1185 = vunpack.c.l.b16 %v1148
        %v1186 = vunpack.c.l.b16 %v1149
        %v1187 = vunpack.c.l.b16 %v1150
        %v1188 = vunpack.c.l.b16 %v1151
        %v1189 = vunpack.c.l.b16 %v1152
        %v1190 = vunpack.c.l.b16 %v1153
        %v1191 = vunpack.c.l.b16 %v1154
        %v1192 = vunpack.c.l.b16 %v1155
        %v1193 = vunpack.c.l.b16 %v1156
        %v1194 = vunpack.c.l.b16 %v1157
        %v1195 = vunpack.c.l.b16 %v1158
        %v1196 = vunpack.c.l.b16 %v1159
        %v1197 = vpack.c.b16 %v1182, %v1181
        %v1198 = vpack.c.b16 %v1184, %v1183
        %v1199 = vpack.c.b16 %v1186, %v1185
        %v1200 = vpack.c.b16 %v1188, %v1187
        %v1201 = vpack.c.b16 %v1190, %v1189
        %v1202 = vpack.c.b16 %v1192, %v1191
        %v1203 = vpack.c.b16 %v1194, %v1193
        %v1204 = vpack.c.b16 %v1196, %v1195
        %1213 = vmatprep.subr.bf16.mxu0 0
        %1214 = vmatpush1.bf16.msra.mxu0 %v1197
        %1215 = vmatprep.subr.bf16.mxu0 0
        %1216 = vmatpush1.bf16.msra.mxu0 %v1198
        %1217 = vmatprep.subr.bf16.mxu0 0
        %1218 = vmatpush1.bf16.msra.mxu0 %v1199
        %1219 = vmatprep.subr.bf16.mxu0 0
        %1220 = vmatpush1.bf16.msra.mxu0 %v1200
        %1221 = vmatprep.subr.bf16.mxu0 0
        %1222 = vmatpush1.bf16.msra.mxu0 %v1201
        %1223 = vmatprep.subr.bf16.mxu0 0
        %1224 = vmatpush1.bf16.msra.mxu0 %v1202
        %1225 = vmatprep.subr.bf16.mxu0 0
        %1226 = vmatpush1.bf16.msra.mxu0 %v1203
        %1227 = vmatprep.subr.bf16.mxu0 0
        %1228 = vmatpush1.bf16.msra.mxu0 %v1204
        %1229 = vmatprep.subr.bf16.mxu0 0
        %1230 = vmatpush1.bf16.msra.mxu0 0
        %1231 = vmatprep.subr.bf16.mxu0 0
        %1232 = vmatpush1.bf16.msra.mxu0 0
        %1233 = vmatprep.subr.bf16.mxu0 0
        %1234 = vmatpush1.bf16.msra.mxu0 0
        %1235 = vmatprep.subr.bf16.mxu0 0
        %1236 = vmatpush1.bf16.msra.mxu0 0
        %1237 = vmatprep.subr.bf16.mxu0 0
        %1238 = vmatpush1.bf16.msra.mxu0 0
        %1239 = vmatprep.subr.bf16.mxu0 0
        %1240 = vmatpush1.bf16.msra.mxu0 0
        %1241 = vmatprep.subr.bf16.mxu0 0
        %1242 = vmatpush1.bf16.msra.mxu0 0
        %1243 = vmatprep.subr.bf16.mxu0 0
        %1244 = vmatpush1.bf16.msra.mxu0 0
        %1245 = vmatprep.mubr.bf16.mxu0 0
        %1246 = vmatmul.mubr.bf16.gmra.mrb[0].mxu0 %v1133
        %v1247 = vpop.f32.mrb[0].mxu0
        %v1248 = vadd.f32 %v1164, %v1247
        %v1249 = vpop.f32.mrb[0].mxu0
        %v1250 = vpop.f32.mrb[0].mxu0
        %v1251 = vadd.f32 %v1164, %v1250
        %v1252 = vpop.f32.mrb[0].mxu0
        %1253 = vmatprep.mubr.bf16.mxu0 0
        %1254 = vmatmul.mubr.bf16.gmra.mrb[0].mxu0 %v1134
        %v1255 = vpop.f32.mrb[0].mxu0
        %v1256 = vadd.f32 %v1164, %v1255
        %v1257 = vpop.f32.mrb[0].mxu0
        %v1258 = vpop.f32.mrb[0].mxu0
        %v1259 = vadd.f32 %v1164, %v1258
        %v1260 = vpop.f32.mrb[0].mxu0
        %1261 = vmatprep.mubr.bf16.mxu0 0
        %1262 = vmatmul.mubr.bf16.gmra.mrb[0].mxu0 %v1135
        %v1263 = vpop.f32.mrb[0].mxu0
        %v1264 = vadd.f32 %v1164, %v1263
        %v1265 = vpop.f32.mrb[0].mxu0
        %v1266 = vpop.f32.mrb[0].mxu0
        %v1267 = vadd.f32 %v1164, %v1266
        %v1268 = vpop.f32.mrb[0].mxu0
        %1269 = vmatprep.mubr.bf16.mxu0 0
        %1270 = vmatmul.mubr.bf16.gmra.mrb[0].mxu0 %v1136
        %v1271 = vpop.f32.mrb[0].mxu0
        %v1272 = vadd.f32 %v1164, %v1271
        %v1273 = vpop.f32.mrb[0].mxu0
        %v1274 = vpop.f32.mrb[0].mxu0
        %v1275 = vadd.f32 %v1164, %v1274
        %v1276 = vpop.f32.mrb[0].mxu0
        %1277 = vmatprep.mubr.bf16.mxu0 0
        %1278 = vmatmul.mubr.bf16.gmra.mrb[0].mxu0 %v1137
        %v1279 = vpop.f32.mrb[0].mxu0
        %v1280 = vadd.f32 %v1164, %v1279
        %v1281 = vpop.f32.mrb[0].mxu0
        %v1282 = vpop.f32.mrb[0].mxu0
        %v1283 = vadd.f32 %v1164, %v1282
        %v1284 = vpop.f32.mrb[0].mxu0
        %1285 = vmatprep.mubr.bf16.mxu0 0
        %1286 = vmatmul.mubr.bf16.gmra.mrb[0].mxu0 %v1138
        %v1287 = vpop.f32.mrb[0].mxu0
        %v1288 = vadd.f32 %v1164, %v1287
        %v1289 = vpop.f32.mrb[0].mxu0
        %v1290 = vpop.f32.mrb[0].mxu0
        %v1291 = vadd.f32 %v1164, %v1290
        %v1292 = vpop.f32.mrb[0].mxu0
        %1293 = vmatprep.mubr.bf16.mxu0 0
        %1294 = vmatmul.mubr.bf16.gmra.mrb[0].mxu0 %v1139
        %v1295 = vpop.f32.mrb[0].mxu0
        %v1296 = vadd.f32 %v1164, %v1295
        %v1297 = vpop.f32.mrb[0].mxu0
        %v1298 = vpop.f32.mrb[0].mxu0
        %v1299 = vadd.f32 %v1164, %v1298
        %v1300 = vpop.f32.mrb[0].mxu0
        %1301 = vmatprep.mubr.bf16.mxu0 0
        %1302 = vmatmul.mubr.bf16.gmra.mrb[0].mxu0 %v1140
        %v1303 = vpop.f32.mrb[0].mxu0
        %v1304 = vadd.f32 %v1164, %v1303
        %v1305 = vpop.f32.mrb[0].mxu0
        %v1306 = vpop.f32.mrb[0].mxu0
        %v1307 = vadd.f32 %v1164, %v1306
        %v1308 = vpop.f32.mrb[0].mxu0
        %1309 = vmatprep.mubr.bf16.mxu0 0
        %1310 = vmatmul.mubr.bf16.gmra.mrb[0].mxu0 %v1141
        %v1311 = vpop.f32.mrb[0].mxu0
        %v1312 = vadd.f32 %v1164, %v1311
        %v1313 = vpop.f32.mrb[0].mxu0
        %v1314 = vpop.f32.mrb[0].mxu0
        %v1315 = vadd.f32 %v1164, %v1314
        %v1316 = vpop.f32.mrb[0].mxu0
        %1317 = vmatprep.mubr.bf16.mxu0 0
        %1318 = vmatmul.mubr.bf16.gmra.mrb[0].mxu0 %v1142
        %v1319 = vpop.f32.mrb[0].mxu0
        %v1320 = vadd.f32 %v1164, %v1319
        %v1321 = vpop.f32.mrb[0].mxu0
        %v1322 = vpop.f32.mrb[0].mxu0
        %v1323 = vadd.f32 %v1164, %v1322
        %v1324 = vpop.f32.mrb[0].mxu0
        %1325 = vdwg.mxu0
        %v1326 = vld [vmem:[%s3 + $0xa] sm:$0x1]
        %v1327 = vld [vmem:[%s3 + $0xb] sm:$0x1]
        %v1328 = vld [vmem:[%s3 + $0xc] sm:$0x1]
        %v1329 = vlaneseq
        %v1330 = vshrl.u32 %v1329, 7
        %v1331 = vsub.s32 0, %v1330
        %v1332 = vrot.slane %v1326, %v1331
        %v1333 = vmul.f32 %v1248, %v1332
        %v1334 = vmul.f32 %v1251, %v1332
        %v1335 = vmul.f32 %v1256, %v1332
        %v1336 = vmul.f32 %v1259, %v1332
        %v1337 = vmul.f32 %v1264, %v1332
        %v1338 = vmul.f32 %v1267, %v1332
        %v1339 = vmul.f32 %v1272, %v1332
        %v1340 = vmul.f32 %v1275, %v1332
        %v1341 = vmul.f32 %v1280, %v1332
        %v1342 = vmul.f32 %v1283, %v1332
        %v1343 = vmul.f32 %v1288, %v1332
        %v1344 = vmul.f32 %v1291, %v1332
        %v1345 = vmul.f32 %v1296, %v1332
        %v1346 = vmul.f32 %v1299, %v1332
        %v1347 = vmul.f32 %v1304, %v1332
        %v1348 = vmul.f32 %v1307, %v1332
        %v1349 = vmul.f32 %v1312, %v1332
        %v1350 = vmul.f32 %v1315, %v1332
        %v1351 = vmul.f32 %v1320, %v1332
        %v1352 = vmul.f32 %v1323, %v1332
        %v1353 = vlaneseq
        %v1354 = vshrl.u32 %v1353, 7
        %v1355 = vsub.s32 0, %v1354
        %v1356 = vrot.slane %v1327, %v1355
        %v1357 = vmul.f32 %v1248, %v1356
        %v1358 = vmul.f32 %v1251, %v1356
        %v1359 = vmul.f32 %v1256, %v1356
        %v1360 = vmul.f32 %v1259, %v1356
        %v1361 = vmul.f32 %v1264, %v1356
        %v1362 = vmul.f32 %v1267, %v1356
        %v1363 = vmul.f32 %v1272, %v1356
        %v1364 = vmul.f32 %v1275, %v1356
        %v1365 = vmul.f32 %v1280, %v1356
        %v1366 = vmul.f32 %v1283, %v1356
        %v1367 = vmul.f32 %v1288, %v1356
        %v1368 = vmul.f32 %v1291, %v1356
        %v1369 = vmul.f32 %v1296, %v1356
        %v1370 = vmul.f32 %v1299, %v1356
        %v1371 = vmul.f32 %v1304, %v1356
        %v1372 = vmul.f32 %v1307, %v1356
        %v1373 = vmul.f32 %v1312, %v1356
        %v1374 = vmul.f32 %v1315, %v1356
        %v1375 = vmul.f32 %v1320, %v1356
        %v1376 = vmul.f32 %v1323, %v1356
        %v1377 = vlaneseq
        %v1378 = vshrl.u32 %v1377, 7
        %v1379 = vsub.s32 0, %v1378
        %v1380 = vrot.slane %v1328, %v1379
        %v1381 = vmul.f32 %v1380, %v1248
        %v1382 = vmul.f32 %v1380, %v1251
        %v1383 = vmul.f32 %v1380, %v1256
        %v1384 = vmul.f32 %v1380, %v1259
        %v1385 = vmul.f32 %v1380, %v1264
        %v1386 = vmul.f32 %v1380, %v1267
        %v1387 = vmul.f32 %v1380, %v1272
        %v1388 = vmul.f32 %v1380, %v1275
        %v1389 = vmul.f32 %v1380, %v1280
        %v1390 = vmul.f32 %v1380, %v1283
        %v1391 = vmul.f32 %v1380, %v1288
        %v1392 = vmul.f32 %v1380, %v1291
        %v1393 = vmul.f32 %v1380, %v1296
        %v1394 = vmul.f32 %v1380, %v1299
        %v1395 = vmul.f32 %v1380, %v1304
        %v1396 = vmul.f32 %v1380, %v1307
        %v1397 = vmul.f32 %v1380, %v1312
        %v1398 = vmul.f32 %v1380, %v1315
        %v1399 = vmul.f32 %v1380, %v1320
        %v1400 = vmul.f32 %v1380, %v1323
        %v1401 = vtanh.pop %v1381
        %v1402 = vtanh.pop %v1382
        %v1403 = vtanh.pop %v1383
        %v1404 = vtanh.pop %v1384
        %v1405 = vtanh.pop %v1385
        %v1406 = vtanh.pop %v1386
        %v1407 = vtanh.pop %v1387
        %v1408 = vtanh.pop %v1388
        %v1409 = vtanh.pop %v1389
        %v1410 = vtanh.pop %v1390
        %v1411 = vtanh.pop %v1391
        %v1412 = vtanh.pop %v1392
        %v1413 = vtanh.pop %v1393
        %v1414 = vtanh.pop %v1394
        %v1415 = vtanh.pop %v1395
        %v1416 = vtanh.pop %v1396
        %v1417 = vtanh.pop %v1397
        %v1418 = vtanh.pop %v1398
        %v1419 = vtanh.pop %v1399
        %v1420 = vtanh.pop %v1400
        %v1421 = vmul.f32 %v1357, %v1401
        %v1422 = vmul.f32 %v1358, %v1402
        %v1423 = vmul.f32 %v1359, %v1403
        %v1424 = vmul.f32 %v1360, %v1404
        %v1425 = vmul.f32 %v1361, %v1405
        %v1426 = vmul.f32 %v1362, %v1406
        %v1427 = vmul.f32 %v1363, %v1407
        %v1428 = vmul.f32 %v1364, %v1408
        %v1429 = vmul.f32 %v1365, %v1409
        %v1430 = vmul.f32 %v1366, %v1410
        %v1431 = vmul.f32 %v1367, %v1411
        %v1432 = vmul.f32 %v1368, %v1412
        %v1433 = vmul.f32 %v1369, %v1413
        %v1434 = vmul.f32 %v1370, %v1414
        %v1435 = vmul.f32 %v1371, %v1415
        %v1436 = vmul.f32 %v1372, %v1416
        %v1437 = vmul.f32 %v1373, %v1417
        %v1438 = vmul.f32 %v1374, %v1418
        %v1439 = vmul.f32 %v1375, %v1419
        %v1440 = vmul.f32 %v1376, %v1420
        %v1441 = vadd.f32 %v1333, %v1421
        %v1442 = vadd.f32 %v1334, %v1422
        %v1443 = vadd.f32 %v1335, %v1423
        %v1444 = vadd.f32 %v1336, %v1424
        %v1445 = vadd.f32 %v1337, %v1425
        %v1446 = vadd.f32 %v1338, %v1426
        %v1447 = vadd.f32 %v1339, %v1427
        %v1448 = vadd.f32 %v1340, %v1428
        %v1449 = vadd.f32 %v1341, %v1429
        %v1450 = vadd.f32 %v1342, %v1430
        %v1451 = vadd.f32 %v1343, %v1431
        %v1452 = vadd.f32 %v1344, %v1432
        %v1453 = vadd.f32 %v1345, %v1433
        %v1454 = vadd.f32 %v1346, %v1434
        %v1455 = vadd.f32 %v1347, %v1435
        %v1456 = vadd.f32 %v1348, %v1436
        %v1457 = vadd.f32 %v1349, %v1437
        %v1458 = vadd.f32 %v1350, %v1438
        %v1459 = vadd.f32 %v1351, %v1439
        %v1460 = vadd.f32 %v1352, %v1440
        %v1461 = vpack.c.bf16 %v1442, %v1441
        %v1462 = vpack.c.bf16 %v1444, %v1443
        %v1463 = vpack.c.bf16 %v1446, %v1445
        %v1464 = vpack.c.bf16 %v1448, %v1447
        %v1465 = vpack.c.bf16 %v1450, %v1449
        %v1466 = vpack.c.bf16 %v1452, %v1451
        %v1467 = vpack.c.bf16 %v1454, %v1453
        %v1468 = vpack.c.bf16 %v1456, %v1455
        %v1469 = vpack.c.bf16 %v1458, %v1457
        %v1470 = vpack.c.bf16 %v1460, %v1459
        %s1471 = scalar_lea.vmem %s2, 192
        %v1472 = vld [vmem:[%s1471] sm:$0xf]
        %v1473 = vld [vmem:[%s1471 + $0x4] sm:$0xf]
        %v1474 = vld [vmem:[%s1471 + $0x8] sm:$0xf]
        %v1475 = vld [vmem:[%s1471 + $0xc] sm:$0xf]
        %v1476 = vld [vmem:[%s1471 + $0x10] sm:$0xf]
        %v1477 = vld [vmem:[%s1471 + $0x14] sm:$0xf]
        %v1478 = vld [vmem:[%s1471 + $0x18] sm:$0xf]
        %v1479 = vld [vmem:[%s1471 + $0x1c] sm:$0xf]
        %v1480 = vld [vmem:[%s1471 + $0x20] sm:$0xf]
        %v1481 = vld [vmem:[%s1471 + $0x24] sm:$0xf]
        %v1482 = vld [vmem:[%s1471 + $0x28] sm:$0xf]
        %v1483 = vld [vmem:[%s1471 + $0x2c] sm:$0xf]
        %v1484 = vld [vmem:[%s1471 + $0x30] sm:$0xf]
        %v1485 = vld [vmem:[%s1471 + $0x34] sm:$0xf]
        %v1486 = vld [vmem:[%s1471 + $0x38] sm:$0xf]
        %v1487 = vld [vmem:[%s1471 + $0x3c] sm:$0xf]
        %v1488 = vld [vmem:[%s3 + $0xd] sm:$0x1]
        %v1489 = vlaneseq
        %v1490 = vshrl.u32 %v1489, 7
        %v1491 = vsub.s32 0, %v1490
        %v1492 = vrot.slane %v1488, %v1491
        %v1509 = vunpack.c.l.b16 %v1472
        %v1510 = vunpack.c.l.b16 %v1473
        %v1511 = vunpack.c.l.b16 %v1474
        %v1512 = vunpack.c.l.b16 %v1475
        %v1513 = vunpack.c.l.b16 %v1476
        %v1514 = vunpack.c.l.b16 %v1477
        %v1515 = vunpack.c.l.b16 %v1478
        %v1516 = vunpack.c.l.b16 %v1479
        %v1517 = vunpack.c.l.b16 %v1480
        %v1518 = vunpack.c.l.b16 %v1481
        %v1519 = vunpack.c.l.b16 %v1482
        %v1520 = vunpack.c.l.b16 %v1483
        %v1521 = vunpack.c.l.b16 %v1484
        %v1522 = vunpack.c.l.b16 %v1485
        %v1523 = vunpack.c.l.b16 %v1486
        %v1524 = vunpack.c.l.b16 %v1487
        %v1525 = vpack.c.b16 %v1510, %v1509
        %v1526 = vpack.c.b16 %v1512, %v1511
        %v1527 = vpack.c.b16 %v1514, %v1513
        %v1528 = vpack.c.b16 %v1516, %v1515
        %v1529 = vpack.c.b16 %v1518, %v1517
        %v1530 = vpack.c.b16 %v1520, %v1519
        %v1531 = vpack.c.b16 %v1522, %v1521
        %v1532 = vpack.c.b16 %v1524, %v1523
        %1541 = vmatprep.subr.bf16.mxu0 0
        %1542 = vmatpush1.bf16.msra.mxu0 %v1525
        %1543 = vmatprep.subr.bf16.mxu0 0
        %1544 = vmatpush1.bf16.msra.mxu0 %v1526
        %1545 = vmatprep.subr.bf16.mxu0 0
        %1546 = vmatpush1.bf16.msra.mxu0 %v1527
        %1547 = vmatprep.subr.bf16.mxu0 0
        %1548 = vmatpush1.bf16.msra.mxu0 %v1528
        %1549 = vmatprep.subr.bf16.mxu0 0
        %1550 = vmatpush1.bf16.msra.mxu0 %v1529
        %1551 = vmatprep.subr.bf16.mxu0 0
        %1552 = vmatpush1.bf16.msra.mxu0 %v1530
        %1553 = vmatprep.subr.bf16.mxu0 0
        %1554 = vmatpush1.bf16.msra.mxu0 %v1531
        %1555 = vmatprep.subr.bf16.mxu0 0
        %1556 = vmatpush1.bf16.msra.mxu0 %v1532
        %1557 = vmatprep.subr.bf16.mxu0 0
        %1558 = vmatpush1.bf16.msra.mxu0 0
        %1559 = vmatprep.subr.bf16.mxu0 0
        %1560 = vmatpush1.bf16.msra.mxu0 0
        %1561 = vmatprep.subr.bf16.mxu0 0
        %1562 = vmatpush1.bf16.msra.mxu0 0
        %1563 = vmatprep.subr.bf16.mxu0 0
        %1564 = vmatpush1.bf16.msra.mxu0 0
        %1565 = vmatprep.subr.bf16.mxu0 0
        %1566 = vmatpush1.bf16.msra.mxu0 0
        %1567 = vmatprep.subr.bf16.mxu0 0
        %1568 = vmatpush1.bf16.msra.mxu0 0
        %1569 = vmatprep.subr.bf16.mxu0 0
        %1570 = vmatpush1.bf16.msra.mxu0 0
        %1571 = vmatprep.subr.bf16.mxu0 0
        %1572 = vmatpush1.bf16.msra.mxu0 0
        %1573 = vmatprep.mubr.bf16.mxu0 0
        %1574 = vmatmul.mubr.bf16.gmra.mrb[0].mxu0 %v1461
        %v1575 = vpop.f32.mrb[0].mxu0
        %v1576 = vadd.f32 %v1492, %v1575
        %v1577 = vpop.f32.mrb[0].mxu0
        %v1578 = vpop.f32.mrb[0].mxu0
        %v1579 = vadd.f32 %v1492, %v1578
        %v1580 = vpop.f32.mrb[0].mxu0
        %1581 = vmatprep.mubr.bf16.mxu0 0
        %1582 = vmatmul.mubr.bf16.gmra.mrb[0].mxu0 %v1462
        %v1583 = vpop.f32.mrb[0].mxu0
        %v1584 = vadd.f32 %v1492, %v1583
        %v1585 = vpop.f32.mrb[0].mxu0
        %v1586 = vpop.f32.mrb[0].mxu0
        %v1587 = vadd.f32 %v1492, %v1586
        %v1588 = vpop.f32.mrb[0].mxu0
        %1589 = vmatprep.mubr.bf16.mxu0 0
        %1590 = vmatmul.mubr.bf16.gmra.mrb[0].mxu0 %v1463
        %v1591 = vpop.f32.mrb[0].mxu0
        %v1592 = vadd.f32 %v1492, %v1591
        %v1593 = vpop.f32.mrb[0].mxu0
        %v1594 = vpop.f32.mrb[0].mxu0
        %v1595 = vadd.f32 %v1492, %v1594
        %v1596 = vpop.f32.mrb[0].mxu0
        %1597 = vmatprep.mubr.bf16.mxu0 0
        %1598 = vmatmul.mubr.bf16.gmra.mrb[0].mxu0 %v1464
        %v1599 = vpop.f32.mrb[0].mxu0
        %v1600 = vadd.f32 %v1492, %v1599
        %v1601 = vpop.f32.mrb[0].mxu0
        %v1602 = vpop.f32.mrb[0].mxu0
        %v1603 = vadd.f32 %v1492, %v1602
        %v1604 = vpop.f32.mrb[0].mxu0
        %1605 = vmatprep.mubr.bf16.mxu0 0
        %1606 = vmatmul.mubr.bf16.gmra.mrb[0].mxu0 %v1465
        %v1607 = vpop.f32.mrb[0].mxu0
        %v1608 = vadd.f32 %v1492, %v1607
        %v1609 = vpop.f32.mrb[0].mxu0
        %v1610 = vpop.f32.mrb[0].mxu0
        %v1611 = vadd.f32 %v1492, %v1610
        %v1612 = vpop.f32.mrb[0].mxu0
        %1613 = vmatprep.mubr.bf16.mxu0 0
        %1614 = vmatmul.mubr.bf16.gmra.mrb[0].mxu0 %v1466
        %v1615 = vpop.f32.mrb[0].mxu0
        %v1616 = vadd.f32 %v1492, %v1615
        %v1617 = vpop.f32.mrb[0].mxu0
        %v1618 = vpop.f32.mrb[0].mxu0
        %v1619 = vadd.f32 %v1492, %v1618
        %v1620 = vpop.f32.mrb[0].mxu0
        %1621 = vmatprep.mubr.bf16.mxu0 0
        %1622 = vmatmul.mubr.bf16.gmra.mrb[0].mxu0 %v1467
        %v1623 = vpop.f32.mrb[0].mxu0
        %v1624 = vadd.f32 %v1492, %v1623
        %v1625 = vpop.f32.mrb[0].mxu0
        %v1626 = vpop.f32.mrb[0].mxu0
        %v1627 = vadd.f32 %v1492, %v1626
        %v1628 = vpop.f32.mrb[0].mxu0
        %1629 = vmatprep.mubr.bf16.mxu0 0
        %1630 = vmatmul.mubr.bf16.gmra.mrb[0].mxu0 %v1468
        %v1631 = vpop.f32.mrb[0].mxu0
        %v1632 = vadd.f32 %v1492, %v1631
        %v1633 = vpop.f32.mrb[0].mxu0
        %v1634 = vpop.f32.mrb[0].mxu0
        %v1635 = vadd.f32 %v1492, %v1634
        %v1636 = vpop.f32.mrb[0].mxu0
        %1637 = vmatprep.mubr.bf16.mxu0 0
        %1638 = vmatmul.mubr.bf16.gmra.mrb[0].mxu0 %v1469
        %v1639 = vpop.f32.mrb[0].mxu0
        %v1640 = vadd.f32 %v1492, %v1639
        %v1641 = vpop.f32.mrb[0].mxu0
        %v1642 = vpop.f32.mrb[0].mxu0
        %v1643 = vadd.f32 %v1492, %v1642
        %v1644 = vpop.f32.mrb[0].mxu0
        %1645 = vmatprep.mubr.bf16.mxu0 0
        %1646 = vmatmul.mubr.bf16.gmra.mrb[0].mxu0 %v1470
        %v1647 = vpop.f32.mrb[0].mxu0
        %v1648 = vadd.f32 %v1492, %v1647
        %v1649 = vpop.f32.mrb[0].mxu0
        %v1650 = vpop.f32.mrb[0].mxu0
        %v1651 = vadd.f32 %v1492, %v1650
        %v1652 = vpop.f32.mrb[0].mxu0
        %1653 = vdwg.mxu0
        %v1654 = vld [vmem:[%s3 + $0xe] sm:$0x1]
        %v1655 = vld [vmem:[%s3 + $0xf] sm:$0x1]
        %v1656 = vld [vmem:[%s3 + $0x10] sm:$0x1]
        %v1657 = vlaneseq
        %v1658 = vshrl.u32 %v1657, 7
        %v1659 = vsub.s32 0, %v1658
        %v1660 = vrot.slane %v1654, %v1659
        %v1661 = vmul.f32 %v1576, %v1660
        %v1662 = vmul.f32 %v1579, %v1660
        %v1663 = vmul.f32 %v1584, %v1660
        %v1664 = vmul.f32 %v1587, %v1660
        %v1665 = vmul.f32 %v1592, %v1660
        %v1666 = vmul.f32 %v1595, %v1660
        %v1667 = vmul.f32 %v1600, %v1660
        %v1668 = vmul.f32 %v1603, %v1660
        %v1669 = vmul.f32 %v1608, %v1660
        %v1670 = vmul.f32 %v1611, %v1660
        %v1671 = vmul.f32 %v1616, %v1660
        %v1672 = vmul.f32 %v1619, %v1660
        %v1673 = vmul.f32 %v1624, %v1660
        %v1674 = vmul.f32 %v1627, %v1660
        %v1675 = vmul.f32 %v1632, %v1660
        %v1676 = vmul.f32 %v1635, %v1660
        %v1677 = vmul.f32 %v1640, %v1660
        %v1678 = vmul.f32 %v1643, %v1660
        %v1679 = vmul.f32 %v1648, %v1660
        %v1680 = vmul.f32 %v1651, %v1660
        %v1681 = vlaneseq
        %v1682 = vshrl.u32 %v1681, 7
        %v1683 = vsub.s32 0, %v1682
        %v1684 = vrot.slane %v1655, %v1683
        %v1685 = vmul.f32 %v1576, %v1684
        %v1686 = vmul.f32 %v1579, %v1684
        %v1687 = vmul.f32 %v1584, %v1684
        %v1688 = vmul.f32 %v1587, %v1684
        %v1689 = vmul.f32 %v1592, %v1684
        %v1690 = vmul.f32 %v1595, %v1684
        %v1691 = vmul.f32 %v1600, %v1684
        %v1692 = vmul.f32 %v1603, %v1684
        %v1693 = vmul.f32 %v1608, %v1684
        %v1694 = vmul.f32 %v1611, %v1684
        %v1695 = vmul.f32 %v1616, %v1684
        %v1696 = vmul.f32 %v1619, %v1684
        %v1697 = vmul.f32 %v1624, %v1684
        %v1698 = vmul.f32 %v1627, %v1684
        %v1699 = vmul.f32 %v1632, %v1684
        %v1700 = vmul.f32 %v1635, %v1684
        %v1701 = vmul.f32 %v1640, %v1684
        %v1702 = vmul.f32 %v1643, %v1684
        %v1703 = vmul.f32 %v1648, %v1684
        %v1704 = vmul.f32 %v1651, %v1684
        %v1705 = vlaneseq
        %v1706 = vshrl.u32 %v1705, 7
        %v1707 = vsub.s32 0, %v1706
        %v1708 = vrot.slane %v1656, %v1707
        %v1709 = vmul.f32 %v1708, %v1576
        %v1710 = vmul.f32 %v1708, %v1579
        %v1711 = vmul.f32 %v1708, %v1584
        %v1712 = vmul.f32 %v1708, %v1587
        %v1713 = vmul.f32 %v1708, %v1592
        %v1714 = vmul.f32 %v1708, %v1595
        %v1715 = vmul.f32 %v1708, %v1600
        %v1716 = vmul.f32 %v1708, %v1603
        %v1717 = vmul.f32 %v1708, %v1608
        %v1718 = vmul.f32 %v1708, %v1611
        %v1719 = vmul.f32 %v1708, %v1616
        %v1720 = vmul.f32 %v1708, %v1619
        %v1721 = vmul.f32 %v1708, %v1624
        %v1722 = vmul.f32 %v1708, %v1627
        %v1723 = vmul.f32 %v1708, %v1632
        %v1724 = vmul.f32 %v1708, %v1635
        %v1725 = vmul.f32 %v1708, %v1640
        %v1726 = vmul.f32 %v1708, %v1643
        %v1727 = vmul.f32 %v1708, %v1648
        %v1728 = vmul.f32 %v1708, %v1651
        %v1729 = vtanh.pop %v1709
        %v1730 = vtanh.pop %v1710
        %v1731 = vtanh.pop %v1711
        %v1732 = vtanh.pop %v1712
        %v1733 = vtanh.pop %v1713
        %v1734 = vtanh.pop %v1714
        %v1735 = vtanh.pop %v1715
        %v1736 = vtanh.pop %v1716
        %v1737 = vtanh.pop %v1717
        %v1738 = vtanh.pop %v1718
        %v1739 = vtanh.pop %v1719
        %v1740 = vtanh.pop %v1720
        %v1741 = vtanh.pop %v1721
        %v1742 = vtanh.pop %v1722
        %v1743 = vtanh.pop %v1723
        %v1744 = vtanh.pop %v1724
        %v1745 = vtanh.pop %v1725
        %v1746 = vtanh.pop %v1726
        %v1747 = vtanh.pop %v1727
        %v1748 = vtanh.pop %v1728
        %v1749 = vmul.f32 %v1685, %v1729
        %v1750 = vmul.f32 %v1686, %v1730
        %v1751 = vmul.f32 %v1687, %v1731
        %v1752 = vmul.f32 %v1688, %v1732
        %v1753 = vmul.f32 %v1689, %v1733
        %v1754 = vmul.f32 %v1690, %v1734
        %v1755 = vmul.f32 %v1691, %v1735
        %v1756 = vmul.f32 %v1692, %v1736
        %v1757 = vmul.f32 %v1693, %v1737
        %v1758 = vmul.f32 %v1694, %v1738
        %v1759 = vmul.f32 %v1695, %v1739
        %v1760 = vmul.f32 %v1696, %v1740
        %v1761 = vmul.f32 %v1697, %v1741
        %v1762 = vmul.f32 %v1698, %v1742
        %v1763 = vmul.f32 %v1699, %v1743
        %v1764 = vmul.f32 %v1700, %v1744
        %v1765 = vmul.f32 %v1701, %v1745
        %v1766 = vmul.f32 %v1702, %v1746
        %v1767 = vmul.f32 %v1703, %v1747
        %v1768 = vmul.f32 %v1704, %v1748
        %v1769 = vadd.f32 %v1661, %v1749
        %v1770 = vadd.f32 %v1662, %v1750
        %v1771 = vadd.f32 %v1663, %v1751
        %v1772 = vadd.f32 %v1664, %v1752
        %v1773 = vadd.f32 %v1665, %v1753
        %v1774 = vadd.f32 %v1666, %v1754
        %v1775 = vadd.f32 %v1667, %v1755
        %v1776 = vadd.f32 %v1668, %v1756
        %v1777 = vadd.f32 %v1669, %v1757
        %v1778 = vadd.f32 %v1670, %v1758
        %v1779 = vadd.f32 %v1671, %v1759
        %v1780 = vadd.f32 %v1672, %v1760
        %v1781 = vadd.f32 %v1673, %v1761
        %v1782 = vadd.f32 %v1674, %v1762
        %v1783 = vadd.f32 %v1675, %v1763
        %v1784 = vadd.f32 %v1676, %v1764
        %v1785 = vadd.f32 %v1677, %v1765
        %v1786 = vadd.f32 %v1678, %v1766
        %v1787 = vadd.f32 %v1679, %v1767
        %v1788 = vadd.f32 %v1680, %v1768
        %v1789 = vadd.f32 %v1769, %v1113
        %v1790 = vadd.f32 %v1770, %v1114
        %v1791 = vadd.f32 %v1771, %v1115
        %v1792 = vadd.f32 %v1772, %v1116
        %v1793 = vadd.f32 %v1773, %v1117
        %v1794 = vadd.f32 %v1774, %v1118
        %v1795 = vadd.f32 %v1775, %v1119
        %v1796 = vadd.f32 %v1776, %v1120
        %v1797 = vadd.f32 %v1777, %v1121
        %v1798 = vadd.f32 %v1778, %v1122
        %v1799 = vadd.f32 %v1779, %v1123
        %v1800 = vadd.f32 %v1780, %v1124
        %v1801 = vadd.f32 %v1781, %v1125
        %v1802 = vadd.f32 %v1782, %v1126
        %v1803 = vadd.f32 %v1783, %v1127
        %v1804 = vadd.f32 %v1784, %v1128
        %v1805 = vadd.f32 %v1785, %v1129
        %v1806 = vadd.f32 %v1786, %v1130
        %v1807 = vadd.f32 %v1787, %v1131
        %v1808 = vadd.f32 %v1788, %v1132
        %v1809 = vtanh.pop %v1789
        %v1810 = vtanh.pop %v1790
        %v1811 = vtanh.pop %v1791
        %v1812 = vtanh.pop %v1792
        %v1813 = vtanh.pop %v1793
        %v1814 = vtanh.pop %v1794
        %v1815 = vtanh.pop %v1795
        %v1816 = vtanh.pop %v1796
        %v1817 = vtanh.pop %v1797
        %v1818 = vtanh.pop %v1798
        %v1819 = vtanh.pop %v1799
        %v1820 = vtanh.pop %v1800
        %v1821 = vtanh.pop %v1801
        %v1822 = vtanh.pop %v1802
        %v1823 = vtanh.pop %v1803
        %v1824 = vtanh.pop %v1804
        %v1825 = vtanh.pop %v1805
        %v1826 = vtanh.pop %v1806
        %v1827 = vtanh.pop %v1807
        %v1828 = vtanh.pop %v1808
        %v1829 = vpack.c.bf16 %v1810, %v1809
        %v1830 = vpack.c.bf16 %v1812, %v1811
        %v1831 = vpack.c.bf16 %v1814, %v1813
        %v1832 = vpack.c.bf16 %v1816, %v1815
        %v1833 = vpack.c.bf16 %v1818, %v1817
        %v1834 = vpack.c.bf16 %v1820, %v1819
        %v1835 = vpack.c.bf16 %v1822, %v1821
        %v1836 = vpack.c.bf16 %v1824, %v1823
        %v1837 = vpack.c.bf16 %v1826, %v1825
        %v1838 = vpack.c.bf16 %v1828, %v1827
        %v1839 = vld [vmem:[%s4] sm:$0xf]
        %v1840 = vld [vmem:[%s4 + $0x4] sm:$0xf]
        %v1841 = vld [vmem:[%s4 + $0x8] sm:$0xf]
        %v1842 = vld [vmem:[%s4 + $0xc] sm:$0xf]
        %v1843 = vld [vmem:[%s4 + $0x10] sm:$0xf]
        %v1844 = vld [vmem:[%s4 + $0x14] sm:$0xf]
        %v1845 = vld [vmem:[%s4 + $0x18] sm:$0xf]
        %v1846 = vld [vmem:[%s4 + $0x1c] sm:$0xf]
        %v1847 = vld [vmem:[%s4 + $0x20] sm:$0xf]
        %v1848 = vld [vmem:[%s4 + $0x24] sm:$0xf]
        %v1849 = vld [vmem:[%s4 + $0x28] sm:$0xf]
        %v1850 = vld [vmem:[%s4 + $0x2c] sm:$0xf]
        %v1851 = vld [vmem:[%s4 + $0x30] sm:$0xf]
        %v1852 = vld [vmem:[%s4 + $0x34] sm:$0xf]
        %v1853 = vld [vmem:[%s4 + $0x38] sm:$0xf]
        %v1854 = vld [vmem:[%s4 + $0x3c] sm:$0xf]
        %v1855 = vld [vmem:[%s5] sm:$0x1]
        %v1857 = vlaneseq
        %v1858 = vshrl.u32 %v1857, 7
        %v1859 = vsub.s32 0, %v1858
        %v1860 = vrot.slane %v1855, %v1859
        %v1878 = vunpack.c.l.b16 %v1839
        %v1879 = vunpack.c.l.b16 %v1840
        %v1880 = vunpack.c.l.b16 %v1841
        %v1881 = vunpack.c.l.b16 %v1842
        %v1882 = vunpack.c.l.b16 %v1843
        %v1883 = vunpack.c.l.b16 %v1844
        %v1884 = vunpack.c.l.b16 %v1845
        %v1885 = vunpack.c.l.b16 %v1846
        %v1886 = vunpack.c.l.b16 %v1847
        %v1887 = vunpack.c.l.b16 %v1848
        %v1888 = vunpack.c.l.b16 %v1849
        %v1889 = vunpack.c.l.b16 %v1850
        %v1890 = vunpack.c.l.b16 %v1851
        %v1891 = vunpack.c.l.b16 %v1852
        %v1892 = vunpack.c.l.b16 %v1853
        %v1893 = vunpack.c.l.b16 %v1854
        %v1894 = vpack.c.b16 %v1879, %v1878
        %v1895 = vpack.c.b16 %v1881, %v1880
        %v1896 = vpack.c.b16 %v1883, %v1882
        %v1897 = vpack.c.b16 %v1885, %v1884
        %v1898 = vpack.c.b16 %v1887, %v1886
        %v1899 = vpack.c.b16 %v1889, %v1888
        %v1900 = vpack.c.b16 %v1891, %v1890
        %v1901 = vpack.c.b16 %v1893, %v1892
        %1910 = vmatprep.subr.bf16.mxu0 0
        %1911 = vmatpush1.bf16.msra.mxu0 %v1894
        %1912 = vmatprep.subr.bf16.mxu0 0
        %1913 = vmatpush1.bf16.msra.mxu0 %v1895
        %1914 = vmatprep.subr.bf16.mxu0 0
        %1915 = vmatpush1.bf16.msra.mxu0 %v1896
        %1916 = vmatprep.subr.bf16.mxu0 0
        %1917 = vmatpush1.bf16.msra.mxu0 %v1897
        %1918 = vmatprep.subr.bf16.mxu0 0
        %1919 = vmatpush1.bf16.msra.mxu0 %v1898
        %1920 = vmatprep.subr.bf16.mxu0 0
        %1921 = vmatpush1.bf16.msra.mxu0 %v1899
        %1922 = vmatprep.subr.bf16.mxu0 0
        %1923 = vmatpush1.bf16.msra.mxu0 %v1900
        %1924 = vmatprep.subr.bf16.mxu0 0
        %1925 = vmatpush1.bf16.msra.mxu0 %v1901
        %1926 = vmatprep.subr.bf16.mxu0 0
        %1927 = vmatpush1.bf16.msra.mxu0 0
        %1928 = vmatprep.subr.bf16.mxu0 0
        %1929 = vmatpush1.bf16.msra.mxu0 0
        %1930 = vmatprep.subr.bf16.mxu0 0
        %1931 = vmatpush1.bf16.msra.mxu0 0
        %1932 = vmatprep.subr.bf16.mxu0 0
        %1933 = vmatpush1.bf16.msra.mxu0 0
        %1934 = vmatprep.subr.bf16.mxu0 0
        %1935 = vmatpush1.bf16.msra.mxu0 0
        %1936 = vmatprep.subr.bf16.mxu0 0
        %1937 = vmatpush1.bf16.msra.mxu0 0
        %1938 = vmatprep.subr.bf16.mxu0 0
        %1939 = vmatpush1.bf16.msra.mxu0 0
        %1940 = vmatprep.subr.bf16.mxu0 0
        %1941 = vmatpush1.bf16.msra.mxu0 0
        %1942 = vmatprep.mubr.bf16.mxu0 0
        %1943 = vmatmul.mubr.bf16.gmra.mrb[0].mxu0 %v1829
        %v1944 = vpop.f32.mrb[0].mxu0
        %v1945 = vadd.f32 %v1860, %v1944
        %v1946 = vpop.f32.mrb[0].mxu0
        %v1947 = vpop.f32.mrb[0].mxu0
        %v1948 = vadd.f32 %v1860, %v1947
        %v1949 = vpop.f32.mrb[0].mxu0
        %1950 = vmatprep.mubr.bf16.mxu0 0
        %1951 = vmatmul.mubr.bf16.gmra.mrb[0].mxu0 %v1830
        %v1952 = vpop.f32.mrb[0].mxu0
        %v1953 = vadd.f32 %v1860, %v1952
        %v1954 = vpop.f32.mrb[0].mxu0
        %v1955 = vpop.f32.mrb[0].mxu0
        %v1956 = vadd.f32 %v1860, %v1955
        %v1957 = vpop.f32.mrb[0].mxu0
        %1958 = vmatprep.mubr.bf16.mxu0 0
        %1959 = vmatmul.mubr.bf16.gmra.mrb[0].mxu0 %v1831
        %v1960 = vpop.f32.mrb[0].mxu0
        %v1961 = vadd.f32 %v1860, %v1960
        %v1962 = vpop.f32.mrb[0].mxu0
        %v1963 = vpop.f32.mrb[0].mxu0
        %v1964 = vadd.f32 %v1860, %v1963
        %v1965 = vpop.f32.mrb[0].mxu0
        %1966 = vmatprep.mubr.bf16.mxu0 0
        %1967 = vmatmul.mubr.bf16.gmra.mrb[0].mxu0 %v1832
        %v1968 = vpop.f32.mrb[0].mxu0
        %v1969 = vadd.f32 %v1860, %v1968
        %v1970 = vpop.f32.mrb[0].mxu0
        %v1971 = vpop.f32.mrb[0].mxu0
        %v1972 = vadd.f32 %v1860, %v1971
        %v1973 = vpop.f32.mrb[0].mxu0
        %1974 = vmatprep.mubr.bf16.mxu0 0
        %1975 = vmatmul.mubr.bf16.gmra.mrb[0].mxu0 %v1833
        %v1976 = vpop.f32.mrb[0].mxu0
        %v1977 = vadd.f32 %v1860, %v1976
        %v1978 = vpop.f32.mrb[0].mxu0
        %v1979 = vpop.f32.mrb[0].mxu0
        %v1980 = vadd.f32 %v1860, %v1979
        %v1981 = vpop.f32.mrb[0].mxu0
        %1982 = vmatprep.mubr.bf16.mxu0 0
        %1983 = vmatmul.mubr.bf16.gmra.mrb[0].mxu0 %v1834
        %v1984 = vpop.f32.mrb[0].mxu0
        %v1985 = vadd.f32 %v1860, %v1984
        %v1986 = vpop.f32.mrb[0].mxu0
        %v1987 = vpop.f32.mrb[0].mxu0
        %v1988 = vadd.f32 %v1860, %v1987
        %v1989 = vpop.f32.mrb[0].mxu0
        %1990 = vmatprep.mubr.bf16.mxu0 0
        %1991 = vmatmul.mubr.bf16.gmra.mrb[0].mxu0 %v1835
        %v1992 = vpop.f32.mrb[0].mxu0
        %v1993 = vadd.f32 %v1860, %v1992
        %v1994 = vpop.f32.mrb[0].mxu0
        %v1995 = vpop.f32.mrb[0].mxu0
        %v1996 = vadd.f32 %v1860, %v1995
        %v1997 = vpop.f32.mrb[0].mxu0
        %1998 = vmatprep.mubr.bf16.mxu0 0
        %1999 = vmatmul.mubr.bf16.gmra.mrb[0].mxu0 %v1836
        %v2000 = vpop.f32.mrb[0].mxu0
        %v2001 = vadd.f32 %v1860, %v2000
        %v2002 = vpop.f32.mrb[0].mxu0
        %v2003 = vpop.f32.mrb[0].mxu0
        %v2004 = vadd.f32 %v1860, %v2003
        %v2005 = vpop.f32.mrb[0].mxu0
        %2006 = vmatprep.mubr.bf16.mxu0 0
        %2007 = vmatmul.mubr.bf16.gmra.mrb[0].mxu0 %v1837
        %v2008 = vpop.f32.mrb[0].mxu0
        %v2009 = vadd.f32 %v1860, %v2008
        %v2010 = vpop.f32.mrb[0].mxu0
        %v2011 = vpop.f32.mrb[0].mxu0
        %v2012 = vadd.f32 %v1860, %v2011
        %v2013 = vpop.f32.mrb[0].mxu0
        %2014 = vmatprep.mubr.bf16.mxu0 0
        %2015 = vmatmul.mubr.bf16.gmra.mrb[0].mxu0 %v1838
        %v2016 = vpop.f32.mrb[0].mxu0
        %v2017 = vadd.f32 %v1860, %v2016
        %v2018 = vpop.f32.mrb[0].mxu0
        %v2019 = vpop.f32.mrb[0].mxu0
        %v2020 = vadd.f32 %v1860, %v2019
        %v2021 = vpop.f32.mrb[0].mxu0
        %2022 = vdwg.mxu0
        %2023 = vst [vmem:[%s245] sm:$0xff] %v1945
        %2024 = vst [vmem:[%s245 + $0x8] sm:$0xff] %v1948
        %2025 = vst [vmem:[%s245 + $0x10] sm:$0xff] %v1953
        %2026 = vst [vmem:[%s245 + $0x18] sm:$0xff] %v1956
        %2027 = vst [vmem:[%s245 + $0x20] sm:$0xff] %v1961
        %2028 = vst [vmem:[%s245 + $0x28] sm:$0xff] %v1964
        %2029 = vst [vmem:[%s245 + $0x30] sm:$0xff] %v1969
        %2030 = vst [vmem:[%s245 + $0x38] sm:$0xff] %v1972
        %2031 = vst [vmem:[%s245 + $0x40] sm:$0xff] %v1977
        %2032 = vst [vmem:[%s245 + $0x48] sm:$0xff] %v1980
        %2033 = vst [vmem:[%s245 + $0x50] sm:$0xff] %v1985
        %2034 = vst [vmem:[%s245 + $0x58] sm:$0xff] %v1988
        %2035 = vst [vmem:[%s245 + $0x60] sm:$0xff] %v1993
        %2036 = vst [vmem:[%s245 + $0x68] sm:$0xff] %v1996
        %2037 = vst [vmem:[%s245 + $0x70] sm:$0xff] %v2001
        %2038 = vst [vmem:[%s245 + $0x78] sm:$0xff] %v2004
        %2039 = vst [vmem:[%s245 + $0x80] sm:$0xff] %v2009
        %2040 = vst [vmem:[%s245 + $0x88] sm:$0xff] %v2012
        %2041 = vst [vmem:[%s245 + $0x90] sm:$0xff] %v2017
        %2042 = vst [vmem:[%s245 + $0x98] sm:$0xff] %v2020
        %s2043 = sand.u32 %s159, 1
        %s2044 = scalar_lea.sflag [#allocation3], %s2043
        %s2045 = sand.u32 %s159, 1
        %s2046 = smul.addr %s2045, 160
        %s2047 = scalar_lea.vmem [#allocation2], %s2046
        // Predicated region
        $region45: #{tpu_custom_call.1} parent=43 // pred_check
          %p2048 = pneg %p169
        $region46: #{tpu_custom_call.1} parent=43 // pred_check_branch
          %2050 = sbr.rel (%p2048) target = $region48
        $region47: #{tpu_custom_call.1} parent=43 // pred_region
          %s2051 = smul.u32 20, %s20
          %s2053 = ssub.s32 2560, 2560
          %2054 = vsyncadd %s2044, %s2053
          %s2055 = smul.addr %s2051, 128
          %s2056 = scalar_lea.hbm %s6, %s2055
          %s2057 = sshll.u32 %s2047, 4
          %s2058 = int_to_ptr.vmem [resolvable:$true] %s2057
          %2063 = dma.vmem_to_hbm [thread:$0]  %s2058, 2560, %s2056, %s2044, 128, 128, 8
        $region48: #{tpu_custom_call.1} parent=43 // pred_fallthru
          _
      $region44: #{tpu_custom_call.1} parent=5 // pred_fallthru
        _
      %p2064 = scmp.le.s32.totalorder 2, %s15
      // Predicated region
      $region49: #{tpu_custom_call.1} parent=5 // pred_check
        %p2065 = pneg %p2064
      $region50: #{tpu_custom_call.1} parent=5 // pred_check_branch
        %2067 = sbr.rel (%p2065) target = $region52
      $region51: #{tpu_custom_call.1} parent=5 // pred_region
        %s2068 = ssub.s32 %s15, 2
        // Predicated region
        $region53: #{tpu_custom_call.1} parent=51 // pred_check
          %p2069 = pneg %p175
        $region54: #{tpu_custom_call.1} parent=51 // pred_check_branch
          %2071 = sbr.rel (%p2069) target = $region56
        $region55: #{tpu_custom_call.1} parent=51 // pred_region
          %s2072 = sand.u32 %s160, 1
          %s2073 = scalar_lea.sflag [#allocation3], %s2072
          %s2074 = sand.u32 %s160, 1
          %s2075 = smul.addr %s2074, 160
          %s2076 = scalar_lea.vmem [#allocation2], %s2075
          %2077 = dma.done %s2073, 2560
        $region56: #{tpu_custom_call.1} parent=51 // pred_fallthru
          _
      $region52: #{tpu_custom_call.1} parent=5 // pred_fallthru
        _
    $region6: #{tpu_custom_call.1} parent=1 // loop_footer
      %s19 = sadd.s32 1, %s15
    $region7: #{tpu_custom_call.1} parent=1 // loop_footer_branch
      %14 = sbr.rel target = $region3
    $region8: #{tpu_custom_call.1} parent=1 // loop_exit
      _
    %2078 = vsyncpa [#allocation3], 1
    %s2079 = scalar_lea.sflag [#allocation3], 1
    %2080 = vsyncpa %s2079, 1

</llo_original>
